<compile_context>
chip_gen: v5e
topology: v5e:2x2
jax: 0.10.0
libtpu: 0.0.40
codegen_flags: <defaults>
</compile_context>

<pallas_src>
import functools
import math

import jax
import jax.numpy as jnp
import numpy as np
from jax import lax
from jax.experimental import pallas as pl
from jax.experimental.pallas import tpu as pltpu

EPS = 1e-5
H = W = 8          # spatial size is hard-wired by the module (dense1 expects C*8*8)
S = H * W          # 64 spatial positions per board


# ------------------------------ Pallas kernel --------------------------------
def _elo_head_kernel(n_batch, c_out,
                     taps_ref, wc_ref, g_ref, be_ref,
                     w1_ref, b1_ref, w2_ref, b2_ref,
                     out_ref, flat_ref):
    # ---- conv 3x3 'same' as ONE MXU matmul: (Cout, 9Cin) @ (9Cin, N*64) ----
    h = jnp.dot(wc_ref[...], taps_ref[...], preferred_element_type=jnp.float32)

    # ---- BatchNorm2d, training-mode batch stats, single pass [review #10] ---
    # (conv bias omitted on purpose: the mean subtraction cancels it exactly)
    cols = float(n_batch * S)
    s1 = jnp.sum(h, axis=1, keepdims=True)                    # (Cout, 1)
    s2 = jnp.sum(h * h, axis=1, keepdims=True)                # (Cout, 1)
    mean = s1 * (1.0 / cols)
    var = s2 * (1.0 / cols) - mean * mean                     # biased variance
    scale = lax.rsqrt(var + EPS) * g_ref[...]                 # gamma / sqrt(var+eps)
    shift = be_ref[...] - mean * scale                        # beta - mean*scale
    h = jnp.maximum(h * scale + shift, 0.0)                   # BN + ReLU, (Cout, N*64)

    # ---- flatten to PyTorch's (N, Cout*H*W) order via VMEM staging ---------
    # flat[n, c*64 + s] = h[c, n*64 + s].  Channels are paired so every store
    # is a full 128-lane, 128-aligned vst: N*Cout/2 stores instead of N*Cout
    # masked (1, 64) stores [review #1].  The pair row is built from a 128-lane
    # window of h with a half-width pltpu.roll (shift 64 on width 128 is
    # direction-invariant) plus one select -- all well-supported lowerings.
    # TODO(synk): when batch is scaled up, replace this unrolled loop with a
    # grid axis over N (BlockSpec-pipelined, "parallel" for v7x) [review #2].
    if c_out % 2 == 0 and n_batch >= 2:
        low = lax.broadcasted_iota(jnp.int32, (1, 2 * S), 1) < S
        for n in range(n_batch):
            # 128-lane window of h containing batch row n's 64 lanes.
            start = n * S if n < n_batch - 1 else (n - 1) * S
            win = h[:, start:start + 2 * S]                   # (Cout, 128)
            rot = pltpu.roll(win, shift=S, axis=1)            # swap 64-lane halves
            lo_src, hi_src = (win, rot) if n < n_batch - 1 else (rot, win)
            for c in range(0, c_out, 2):
                row = jnp.where(low, lo_src[c:c + 1], hi_src[c + 1:c + 2])
                flat_ref[n:n + 1, c * S:(c + 2) * S] = row    # 128-wide, aligned
    else:
        # Fallback (N == 1 or odd Cout): simple masked stores.
        for c in range(c_out):
            for n in range(n_batch):
                flat_ref[n:n + 1, c * S:(c + 1) * S] = h[c:c + 1, n * S:(n + 1) * S]

    # ---- dense1 (bf16 operands, f32 accumulate) + ReLU ---------------------
    a = flat_ref[...].astype(w1_ref.dtype)                    # (N, Cout*64)
    z = jnp.dot(a, w1_ref[...],
                preferred_element_type=jnp.float32) + b1_ref[...]   # (N, hidden)
    z = jnp.maximum(z, 0.0)

    # ---- dense2: single output unit -> VPU multiply + cross-lane reduce ----
    # TODO(synk): for large batch make this writeback lane-dense as (1, N)
    # [review #9]; at N=2 the (N, 1) column store is negligible.
    out_ref[...] = jnp.sum(z * w2_ref[...], axis=1, keepdims=True) + b2_ref[...]


# --------------------------------- glue --------------------------------------
def _im2col_cr(x_nchw):
    """(N, Cin, 8, 8) -> (9*Cin, N*64); rows = (tap, ci), cols = (n, y*8+x)."""
    n, c, h, w = x_nchw.shape
    xp = jnp.pad(x_nchw, ((0, 0), (0, 0), (1, 1), (1, 1)))
    taps = [xp[:, :, dy:dy + h, dx:dx + w]       # (N, Cin, 8, 8)
              .reshape(n, c, h * w)
              .transpose(1, 0, 2)                # (Cin, N, 64)
              .reshape(c, n * h * w)
            for dy in range(3) for dx in range(3)]
    return jnp.concatenate(taps, axis=0)         # (9*Cin, N*64)


def pack_params(params, dense_dtype=jnp.bfloat16):
    """One-time, kernel-ready weight packing [review #3, #4].

    Done once at init so the per-step path never repays the w1 transpose or
    the conv-weight flattening.  w1 is stored bf16 (the ~1 MiB dominant DMA
    term); all other tensors stay f32.  conv_b is intentionally dropped: it is
    cancelled exactly by the training-mode BN mean subtraction.
    """
    c_out = params["conv_w"].shape[0]
    hidden = params["w1"].shape[0]
    return dict(
        wc=params["conv_w"].transpose(0, 2, 3, 1)
            .reshape(c_out, -1).astype(jnp.float32),          # (Cout, 9*Cin)
        g=params["bn_g"].reshape(c_out, 1).astype(jnp.float32),
        be=params["bn_b"].reshape(c_out, 1).astype(jnp.float32),
        w1t=params["w1"].T.astype(dense_dtype),               # (Cout*64, hidden) bf16
        b1=params["b1"].reshape(1, hidden).astype(jnp.float32),
        w2=params["w2"].reshape(1, hidden).astype(jnp.float32),
        b2=params["b2"].reshape(1, 1).astype(jnp.float32),
    )


def chess_elo_head_forward(x_nchw, packed):
    """ChessEloHead forward. x: (N, Cin, 8, 8) NCHW, packed = pack_params(...)."""
    n, c_in, h, w = x_nchw.shape
    assert (h, w) == (H, W)
    c_out = packed["wc"].shape[0]

    # TODO(synk): at large N / Cin, fold the im2col into the kernel instead of
    # materializing (9*Cin, N*64) in HBM (review #8); at N=2 it is ~36 KiB.
    taps = _im2col_cr(x_nchw.astype(jnp.float32))             # (9*Cin, N*64)

    vmem = pl.BlockSpec(memory_space=pltpu.MemorySpace.VMEM)
    out = pl.pallas_call(
        functools.partial(_elo_head_kernel, n, c_out),
        out_shape=jax.ShapeDtypeStruct((n, 1), jnp.float32),
        in_specs=[vmem] * 8,
        out_specs=vmem,
        scratch_shapes=[pltpu.VMEM((n, c_out * S), jnp.float32)],
        # Gridless and fully VMEM-resident: ~0.6 MiB total with bf16 w1, far
        # under every generation's scoped-VMEM default.
        # TODO(synk): once batch is scaled up, add a grid over N with
        # BlockSpec-tiled taps/flat and
        # compiler_params=pltpu.CompilerParams(dimension_semantics=("parallel",))
        # so v7x's two TensorCores are both used and DMA overlaps compute
        # (reviews #2, #5, #6, #7).
    )(taps, packed["wc"], packed["g"], packed["be"],
      packed["w1t"], packed["b1"], packed["w2"], packed["b2"])
    return out[:, 0]


# ------------------------ deterministic parameter init -----------------------
def init_params(key, c_in, c_hid=32, hidden=128):
    f = c_hid * H * W
    k = jax.random.split(key, 8)
    bc = 1.0 / math.sqrt(c_in * 9)
    bd1 = 1.0 / math.sqrt(f)
    bd2 = 1.0 / math.sqrt(hidden)
    return dict(
        conv_w=jax.random.uniform(k[0], (c_hid, c_in, 3, 3), jnp.float32, -bc, bc),
        conv_b=jax.random.uniform(k[1], (c_hid,), jnp.float32, -bc, bc),
        bn_g=1.0 + 0.1 * jax.random.normal(k[2], (c_hid,), jnp.float32),
        bn_b=0.1 * jax.random.normal(k[3], (c_hid,), jnp.float32),
        w1=jax.random.uniform(k[4], (hidden, f), jnp.float32, -bd1, bd1),
        b1=jax.random.uniform(k[5], (hidden,), jnp.float32, -bd1, bd1),
        w2=jax.random.uniform(k[6], (1, hidden), jnp.float32, -bd2, bd2),
        b2=jax.random.uniform(k[7], (1,), jnp.float32, -bd2, bd2),
    )


# --------------------------- pure-JAX reference -------------------------------
def reference_forward(x_nchw, params):
    x = x_nchw.astype(jnp.float32)
    w = params["conv_w"]
    dn = lax.conv_dimension_numbers(x.shape, w.shape, ("NCHW", "OIHW", "NCHW"))
    y = lax.conv_general_dilated(x, w, (1, 1), "SAME", dimension_numbers=dn)
    y = y + params["conv_b"].reshape(1, -1, 1, 1)
    m = jnp.mean(y, axis=(0, 2, 3), keepdims=True)
    v = jnp.mean((y - m) ** 2, axis=(0, 2, 3), keepdims=True)
    y = (y - m) * lax.rsqrt(v + EPS)
    y = y * params["bn_g"].reshape(1, -1, 1, 1) + params["bn_b"].reshape(1, -1, 1, 1)
    y = jax.nn.relu(y)
    a = y.reshape(y.shape[0], -1)                       # PyTorch view(len(x), -1)
    z = jax.nn.relu(a @ params["w1"].T + params["b1"])
    out = z @ params["w2"].T + params["b2"]
    return out[:, 0]                                    # squeeze(-1)


# ----------------------------------- main -------------------------------------
if __name__ == "__main__":
    IN_FILTERS, HID_FILTERS, HIDDEN = 8, 32, 128
    N = 2

    key = jax.random.PRNGKey(0)
    kx, kp = jax.random.split(key)
    x = jax.random.normal(kx, (N, IN_FILTERS, H, W), jnp.float32)   # NCHW
    params = init_params(kp, IN_FILTERS, HID_FILTERS, HIDDEN)

    packed = pack_params(params)            # one-time packing, outside the step
    fwd = jax.jit(chess_elo_head_forward)
    out = jax.block_until_ready(fwd(x, packed))
    ref = jax.block_until_ready(reference_forward(x, params))
    # Tolerance loosened vs the pure-f32 version because dense1 runs in bf16
    # (review #4 / correctness note).
    np.testing.assert_allclose(np.asarray(out), np.asarray(ref),
                               rtol=2e-2, atol=1e-2)
    print("KERNEL_OK")
</pallas_src>

<mosaic_0001>
module attributes {stable_mosaic.version = 11 : i64} {
  func.func @_elo_head_kernel(%arg0: memref<72x128xf32, #tpu.memory_space<vmem>>, %arg1: memref<32x72xf32, #tpu.memory_space<vmem>>, %arg2: memref<32x1xf32, #tpu.memory_space<vmem>>, %arg3: memref<32x1xf32, #tpu.memory_space<vmem>>, %arg4: memref<2048x128xbf16, #tpu.memory_space<vmem>>, %arg5: memref<1x128xf32, #tpu.memory_space<vmem>>, %arg6: memref<1x128xf32, #tpu.memory_space<vmem>>, %arg7: memref<1x1xf32, #tpu.memory_space<vmem>>, %arg8: memref<2x1xf32, #tpu.memory_space<vmem>>, %arg9: memref<2x2048xf32, #tpu.memory_space<vmem>>) attributes {dimension_semantics = [], scalar_prefetch = 0 : i64, scratch_operands = 1 : i64, tpu.core_type = #tpu.core_type<tc>} {
    %c0 = arith.constant 0 : index
    %c0_0 = arith.constant 0 : index
    %0 = vector.load %arg1[%c0, %c0_0] : memref<32x72xf32, #tpu.memory_space<vmem>>, vector<32x72xf32>
    %c0_1 = arith.constant 0 : index
    %c0_2 = arith.constant 0 : index
    %1 = vector.load %arg0[%c0_1, %c0_2] : memref<72x128xf32, #tpu.memory_space<vmem>>, vector<72x128xf32>
    %cst = arith.constant dense<0.000000e+00> : vector<32x128xf32>
    %2 = tpu.matmul %0, %1, %cst {dimension_numbers = #tpu.dot_dimension_numbers<[1], [0], [0], [1], [0, 0, 1, 1], [], []>} : vector<32x72xf32>, vector<72x128xf32>, vector<32x128xf32> -> vector<32x128xf32>
    %cst_3 = arith.constant dense<0.000000e+00> : vector<32xf32>
    %3 = vector.multi_reduction <add>, %2, %cst_3 [1] : vector<32x128xf32> to vector<32xf32>
    %4 = vector.shape_cast %3 : vector<32xf32> to vector<32x1xf32>
    %5 = arith.mulf %2, %2 : vector<32x128xf32>
    %cst_4 = arith.constant dense<0.000000e+00> : vector<32xf32>
    %6 = vector.multi_reduction <add>, %5, %cst_4 [1] : vector<32x128xf32> to vector<32xf32>
    %7 = vector.shape_cast %6 : vector<32xf32> to vector<32x1xf32>
    %cst_5 = arith.constant 7.812500e-03 : f32
    %8 = vector.broadcast %cst_5 : f32 to vector<32x1xf32>
    %9 = arith.mulf %4, %8 : vector<32x1xf32>
    %cst_6 = arith.constant 7.812500e-03 : f32
    %10 = vector.broadcast %cst_6 : f32 to vector<32x1xf32>
    %11 = arith.mulf %7, %10 : vector<32x1xf32>
    %12 = arith.mulf %9, %9 : vector<32x1xf32>
    %13 = arith.subf %11, %12 : vector<32x1xf32>
    %cst_7 = arith.constant 9.99999974E-6 : f32
    %14 = vector.broadcast %cst_7 : f32 to vector<32x1xf32>
    %15 = arith.addf %13, %14 : vector<32x1xf32>
    %16 = math.rsqrt %15 : vector<32x1xf32>
    %c0_8 = arith.constant 0 : index
    %c0_9 = arith.constant 0 : index
    %17 = vector.load %arg2[%c0_8, %c0_9] : memref<32x1xf32, #tpu.memory_space<vmem>>, vector<32x1xf32>
    %18 = arith.mulf %16, %17 : vector<32x1xf32>
    %c0_10 = arith.constant 0 : index
    %c0_11 = arith.constant 0 : index
    %19 = vector.load %arg3[%c0_10, %c0_11] : memref<32x1xf32, #tpu.memory_space<vmem>>, vector<32x1xf32>
    %20 = arith.mulf %9, %18 : vector<32x1xf32>
    %21 = arith.subf %19, %20 : vector<32x1xf32>
    %22 = vector.broadcast %18 : vector<32x1xf32> to vector<32x128xf32>
    %23 = arith.mulf %2, %22 : vector<32x128xf32>
    %24 = vector.broadcast %21 : vector<32x1xf32> to vector<32x128xf32>
    %25 = arith.addf %23, %24 : vector<32x128xf32>
    %cst_12 = arith.constant 0.000000e+00 : f32
    %26 = vector.broadcast %cst_12 : f32 to vector<32x128xf32>
    %27 = arith.maximumf %25, %26 : vector<32x128xf32>
    %28 = tpu.iota {dimensions = array<i32: 1>} : vector<1x128xi32>
    %c64_i32 = arith.constant 64 : i32
    %29 = vector.broadcast %c64_i32 : i32 to vector<1x128xi32>
    %30 = arith.cmpi slt, %28, %29 : vector<1x128xi32>
    %c64_i32_13 = arith.constant 64 : i32
    %31 = tpu.dynamic_rotate %27 by %c64_i32_13 dim 1 : vector<32x128xf32>, i32 -> vector<32x128xf32>
    %32 = vector.extract_strided_slice %27 {offsets = [0, 0], sizes = [1, 128], strides = [1, 1]} : vector<32x128xf32> to vector<1x128xf32>
    %33 = vector.extract_strided_slice %31 {offsets = [1, 0], sizes = [1, 128], strides = [1, 1]} : vector<32x128xf32> to vector<1x128xf32>
    %34 = arith.select %30, %32, %33 : vector<1x128xi1>, vector<1x128xf32>
    %c0_14 = arith.constant 0 : index
    %c0_15 = arith.constant 0 : index
    %35 = vector.load %arg9[%c0_14, %c0_15] : memref<2x2048xf32, #tpu.memory_space<vmem>>, vector<1x128xf32>
    tpu.vector_store %arg9[%c0_14, %c0_15], %34 {strides = array<i32>} : memref<2x2048xf32, #tpu.memory_space<vmem>>, vector<1x128xf32>,
    %36 = vector.extract_strided_slice %27 {offsets = [2, 0], sizes = [1, 128], strides = [1, 1]} : vector<32x128xf32> to vector<1x128xf32>
    %37 = vector.extract_strided_slice %31 {offsets = [3, 0], sizes = [1, 128], strides = [1, 1]} : vector<32x128xf32> to vector<1x128xf32>
    %38 = arith.select %30, %36, %37 : vector<1x128xi1>, vector<1x128xf32>
    %c0_16 = arith.constant 0 : index
    %c128 = arith.constant 128 : index
    %39 = vector.load %arg9[%c0_16, %c128] : memref<2x2048xf32, #tpu.memory_space<vmem>>, vector<1x128xf32>
    tpu.vector_store %arg9[%c0_16, %c128], %38 {strides = array<i32>} : memref<2x2048xf32, #tpu.memory_space<vmem>>, vector<1x128xf32>,
    %40 = vector.extract_strided_slice %27 {offsets = [4, 0], sizes = [1, 128], strides = [1, 1]} : vector<32x128xf32> to vector<1x128xf32>
    %41 = vector.extract_strided_slice %31 {offsets = [5, 0], sizes = [1, 128], strides = [1, 1]} : vector<32x128xf32> to vector<1x128xf32>
    %42 = arith.select %30, %40, %41 : vector<1x128xi1>, vector<1x128xf32>
    %c0_17 = arith.constant 0 : index
    %c256 = arith.constant 256 : index
    %43 = vector.load %arg9[%c0_17, %c256] : memref<2x2048xf32, #tpu.memory_space<vmem>>, vector<1x128xf32>
    tpu.vector_store %arg9[%c0_17, %c256], %42 {strides = array<i32>} : memref<2x2048xf32, #tpu.memory_space<vmem>>, vector<1x128xf32>,
    %44 = vector.extract_strided_slice %27 {offsets = [6, 0], sizes = [1, 128], strides = [1, 1]} : vector<32x128xf32> to vector<1x128xf32>
    %45 = vector.extract_strided_slice %31 {offsets = [7, 0], sizes = [1, 128], strides = [1, 1]} : vector<32x128xf32> to vector<1x128xf32>
    %46 = arith.select %30, %44, %45 : vector<1x128xi1>, vector<1x128xf32>
    %c0_18 = arith.constant 0 : index
    %c384 = arith.constant 384 : index
    %47 = vector.load %arg9[%c0_18, %c384] : memref<2x2048xf32, #tpu.memory_space<vmem>>, vector<1x128xf32>
    tpu.vector_store %arg9[%c0_18, %c384], %46 {strides = array<i32>} : memref<2x2048xf32, #tpu.memory_space<vmem>>, vector<1x128xf32>,
    %48 = vector.extract_strided_slice %27 {offsets = [8, 0], sizes = [1, 128], strides = [1, 1]} : vector<32x128xf32> to vector<1x128xf32>
    %49 = vector.extract_strided_slice %31 {offsets = [9, 0], sizes = [1, 128], strides = [1, 1]} : vector<32x128xf32> to vector<1x128xf32>
    %50 = arith.select %30, %48, %49 : vector<1x128xi1>, vector<1x128xf32>
    %c0_19 = arith.constant 0 : index
    %c512 = arith.constant 512 : index
    %51 = vector.load %arg9[%c0_19, %c512] : memref<2x2048xf32, #tpu.memory_space<vmem>>, vector<1x128xf32>
    tpu.vector_store %arg9[%c0_19, %c512], %50 {strides = array<i32>} : memref<2x2048xf32, #tpu.memory_space<vmem>>, vector<1x128xf32>,
    %52 = vector.extract_strided_slice %27 {offsets = [10, 0], sizes = [1, 128], strides = [1, 1]} : vector<32x128xf32> to vector<1x128xf32>
    %53 = vector.extract_strided_slice %31 {offsets = [11, 0], sizes = [1, 128], strides = [1, 1]} : vector<32x128xf32> to vector<1x128xf32>
    %54 = arith.select %30, %52, %53 : vector<1x128xi1>, vector<1x128xf32>
    %c0_20 = arith.constant 0 : index
    %c640 = arith.constant 640 : index
    %55 = vector.load %arg9[%c0_20, %c640] : memref<2x2048xf32, #tpu.memory_space<vmem>>, vector<1x128xf32>
    tpu.vector_store %arg9[%c0_20, %c640], %54 {strides = array<i32>} : memref<2x2048xf32, #tpu.memory_space<vmem>>, vector<1x128xf32>,
    %56 = vector.extract_strided_slice %27 {offsets = [12, 0], sizes = [1, 128], strides = [1, 1]} : vector<32x128xf32> to vector<1x128xf32>
    %57 = vector.extract_strided_slice %31 {offsets = [13, 0], sizes = [1, 128], strides = [1, 1]} : vector<32x128xf32> to vector<1x128xf32>
    %58 = arith.select %30, %56, %57 : vector<1x128xi1>, vector<1x128xf32>
    %c0_21 = arith.constant 0 : index
    %c768 = arith.constant 768 : index
    %59 = vector.load %arg9[%c0_21, %c768] : memref<2x2048xf32, #tpu.memory_space<vmem>>, vector<1x128xf32>
    tpu.vector_store %arg9[%c0_21, %c768], %58 {strides = array<i32>} : memref<2x2048xf32, #tpu.memory_space<vmem>>, vector<1x128xf32>,
    %60 = vector.extract_strided_slice %27 {offsets = [14, 0], sizes = [1, 128], strides = [1, 1]} : vector<32x128xf32> to vector<1x128xf32>
    %61 = vector.extract_strided_slice %31 {offsets = [15, 0], sizes = [1, 128], strides = [1, 1]} : vector<32x128xf32> to vector<1x128xf32>
    %62 = arith.select %30, %60, %61 : vector<1x128xi1>, vector<1x128xf32>
    %c0_22 = arith.constant 0 : index
    %c896 = arith.constant 896 : index
    %63 = vector.load %arg9[%c0_22, %c896] : memref<2x2048xf32, #tpu.memory_space<vmem>>, vector<1x128xf32>
    tpu.vector_store %arg9[%c0_22, %c896], %62 {strides = array<i32>} : memref<2x2048xf32, #tpu.memory_space<vmem>>, vector<1x128xf32>,
    %64 = vector.extract_strided_slice %27 {offsets = [16, 0], sizes = [1, 128], strides = [1, 1]} : vector<32x128xf32> to vector<1x128xf32>
    %65 = vector.extract_strided_slice %31 {offsets = [17, 0], sizes = [1, 128], strides = [1, 1]} : vector<32x128xf32> to vector<1x128xf32>
    %66 = arith.select %30, %64, %65 : vector<1x128xi1>, vector<1x128xf32>
    %c0_23 = arith.constant 0 : index
    %c1024 = arith.constant 1024 : index
    %67 = vector.load %arg9[%c0_23, %c1024] : memref<2x2048xf32, #tpu.memory_space<vmem>>, vector<1x128xf32>
    tpu.vector_store %arg9[%c0_23, %c1024], %66 {strides = array<i32>} : memref<2x2048xf32, #tpu.memory_space<vmem>>, vector<1x128xf32>,
    %68 = vector.extract_strided_slice %27 {offsets = [18, 0], sizes = [1, 128], strides = [1, 1]} : vector<32x128xf32> to vector<1x128xf32>
    %69 = vector.extract_strided_slice %31 {offsets = [19, 0], sizes = [1, 128], strides = [1, 1]} : vector<32x128xf32> to vector<1x128xf32>
    %70 = arith.select %30, %68, %69 : vector<1x128xi1>, vector<1x128xf32>
    %c0_24 = arith.constant 0 : index
    %c1152 = arith.constant 1152 : index
    %71 = vector.load %arg9[%c0_24, %c1152] : memref<2x2048xf32, #tpu.memory_space<vmem>>, vector<1x128xf32>
    tpu.vector_store %arg9[%c0_24, %c1152], %70 {strides = array<i32>} : memref<2x2048xf32, #tpu.memory_space<vmem>>, vector<1x128xf32>,
    %72 = vector.extract_strided_slice %27 {offsets = [20, 0], sizes = [1, 128], strides = [1, 1]} : vector<32x128xf32> to vector<1x128xf32>
    %73 = vector.extract_strided_slice %31 {offsets = [21, 0], sizes = [1, 128], strides = [1, 1]} : vector<32x128xf32> to vector<1x128xf32>
    %74 = arith.select %30, %72, %73 : vector<1x128xi1>, vector<1x128xf32>
    %c0_25 = arith.constant 0 : index
    %c1280 = arith.constant 1280 : index
    %75 = vector.load %arg9[%c0_25, %c1280] : memref<2x2048xf32, #tpu.memory_space<vmem>>, vector<1x128xf32>
    tpu.vector_store %arg9[%c0_25, %c1280], %74 {strides = array<i32>} : memref<2x2048xf32, #tpu.memory_space<vmem>>, vector<1x128xf32>,
    %76 = vector.extract_strided_slice %27 {offsets = [22, 0], sizes = [1, 128], strides = [1, 1]} : vector<32x128xf32> to vector<1x128xf32>
    %77 = vector.extract_strided_slice %31 {offsets = [23, 0], sizes = [1, 128], strides = [1, 1]} : vector<32x128xf32> to vector<1x128xf32>
    %78 = arith.select %30, %76, %77 : vector<1x128xi1>, vector<1x128xf32>
    %c0_26 = arith.constant 0 : index
    %c1408 = arith.constant 1408 : index
    %79 = vector.load %arg9[%c0_26, %c1408] : memref<2x2048xf32, #tpu.memory_space<vmem>>, vector<1x128xf32>
    tpu.vector_store %arg9[%c0_26, %c1408], %78 {strides = array<i32>} : memref<2x2048xf32, #tpu.memory_space<vmem>>, vector<1x128xf32>,
    %80 = vector.extract_strided_slice %27 {offsets = [24, 0], sizes = [1, 128], strides = [1, 1]} : vector<32x128xf32> to vector<1x128xf32>
    %81 = vector.extract_strided_slice %31 {offsets = [25, 0], sizes = [1, 128], strides = [1, 1]} : vector<32x128xf32> to vector<1x128xf32>
    %82 = arith.select %30, %80, %81 : vector<1x128xi1>, vector<1x128xf32>
    %c0_27 = arith.constant 0 : index
    %c1536 = arith.constant 1536 : index
    %83 = vector.load %arg9[%c0_27, %c1536] : memref<2x2048xf32, #tpu.memory_space<vmem>>, vector<1x128xf32>
    tpu.vector_store %arg9[%c0_27, %c1536], %82 {strides = array<i32>} : memref<2x2048xf32, #tpu.memory_space<vmem>>, vector<1x128xf32>,
    %84 = vector.extract_strided_slice %27 {offsets = [26, 0], sizes = [1, 128], strides = [1, 1]} : vector<32x128xf32> to vector<1x128xf32>
    %85 = vector.extract_strided_slice %31 {offsets = [27, 0], sizes = [1, 128], strides = [1, 1]} : vector<32x128xf32> to vector<1x128xf32>
    %86 = arith.select %30, %84, %85 : vector<1x128xi1>, vector<1x128xf32>
    %c0_28 = arith.constant 0 : index
    %c1664 = arith.constant 1664 : index
    %87 = vector.load %arg9[%c0_28, %c1664] : memref<2x2048xf32, #tpu.memory_space<vmem>>, vector<1x128xf32>
    tpu.vector_store %arg9[%c0_28, %c1664], %86 {strides = array<i32>} : memref<2x2048xf32, #tpu.memory_space<vmem>>, vector<1x128xf32>,
    %88 = vector.extract_strided_slice %27 {offsets = [28, 0], sizes = [1, 128], strides = [1, 1]} : vector<32x128xf32> to vector<1x128xf32>
    %89 = vector.extract_strided_slice %31 {offsets = [29, 0], sizes = [1, 128], strides = [1, 1]} : vector<32x128xf32> to vector<1x128xf32>
    %90 = arith.select %30, %88, %89 : vector<1x128xi1>, vector<1x128xf32>
    %c0_29 = arith.constant 0 : index
    %c1792 = arith.constant 1792 : index
    %91 = vector.load %arg9[%c0_29, %c1792] : memref<2x2048xf32, #tpu.memory_space<vmem>>, vector<1x128xf32>
    tpu.vector_store %arg9[%c0_29, %c1792], %90 {strides = array<i32>} : memref<2x2048xf32, #tpu.memory_space<vmem>>, vector<1x128xf32>,
    %92 = vector.extract_strided_slice %27 {offsets = [30, 0], sizes = [1, 128], strides = [1, 1]} : vector<32x128xf32> to vector<1x128xf32>
    %93 = vector.extract_strided_slice %31 {offsets = [31, 0], sizes = [1, 128], strides = [1, 1]} : vector<32x128xf32> to vector<1x128xf32>
    %94 = arith.select %30, %92, %93 : vector<1x128xi1>, vector<1x128xf32>
    %c0_30 = arith.constant 0 : index
    %c1920 = arith.constant 1920 : index
    %95 = vector.load %arg9[%c0_30, %c1920] : memref<2x2048xf32, #tpu.memory_space<vmem>>, vector<1x128xf32>
    tpu.vector_store %arg9[%c0_30, %c1920], %94 {strides = array<i32>} : memref<2x2048xf32, #tpu.memory_space<vmem>>, vector<1x128xf32>,
    %c64_i32_31 = arith.constant 64 : i32
    %96 = tpu.dynamic_rotate %27 by %c64_i32_31 dim 1 : vector<32x128xf32>, i32 -> vector<32x128xf32>
    %97 = vector.extract_strided_slice %96 {offsets = [0, 0], sizes = [1, 128], strides = [1, 1]} : vector<32x128xf32> to vector<1x128xf32>
    %98 = vector.extract_strided_slice %27 {offsets = [1, 0], sizes = [1, 128], strides = [1, 1]} : vector<32x128xf32> to vector<1x128xf32>
    %99 = arith.select %30, %97, %98 : vector<1x128xi1>, vector<1x128xf32>
    %c1 = arith.constant 1 : index
    %c0_32 = arith.constant 0 : index
    %100 = vector.load %arg9[%c1, %c0_32] : memref<2x2048xf32, #tpu.memory_space<vmem>>, vector<1x128xf32>
    tpu.vector_store %arg9[%c1, %c0_32], %99 {strides = array<i32>} : memref<2x2048xf32, #tpu.memory_space<vmem>>, vector<1x128xf32>,
    %101 = vector.extract_strided_slice %96 {offsets = [2, 0], sizes = [1, 128], strides = [1, 1]} : vector<32x128xf32> to vector<1x128xf32>
    %102 = vector.extract_strided_slice %27 {offsets = [3, 0], sizes = [1, 128], strides = [1, 1]} : vector<32x128xf32> to vector<1x128xf32>
    %103 = arith.select %30, %101, %102 : vector<1x128xi1>, vector<1x128xf32>
    %c1_33 = arith.constant 1 : index
    %c128_34 = arith.constant 128 : index
    %104 = vector.load %arg9[%c1_33, %c128_34] : memref<2x2048xf32, #tpu.memory_space<vmem>>, vector<1x128xf32>
    tpu.vector_store %arg9[%c1_33, %c128_34], %103 {strides = array<i32>} : memref<2x2048xf32, #tpu.memory_space<vmem>>, vector<1x128xf32>,
    %105 = vector.extract_strided_slice %96 {offsets = [4, 0], sizes = [1, 128], strides = [1, 1]} : vector<32x128xf32> to vector<1x128xf32>
    %106 = vector.extract_strided_slice %27 {offsets = [5, 0], sizes = [1, 128], strides = [1, 1]} : vector<32x128xf32> to vector<1x128xf32>
    %107 = arith.select %30, %105, %106 : vector<1x128xi1>, vector<1x128xf32>
    %c1_35 = arith.constant 1 : index
    %c256_36 = arith.constant 256 : index
    %108 = vector.load %arg9[%c1_35, %c256_36] : memref<2x2048xf32, #tpu.memory_space<vmem>>, vector<1x128xf32>
    tpu.vector_store %arg9[%c1_35, %c256_36], %107 {strides = array<i32>} : memref<2x2048xf32, #tpu.memory_space<vmem>>, vector<1x128xf32>,
    %109 = vector.extract_strided_slice %96 {offsets = [6, 0], sizes = [1, 128], strides = [1, 1]} : vector<32x128xf32> to vector<1x128xf32>
    %110 = vector.extract_strided_slice %27 {offsets = [7, 0], sizes = [1, 128], strides = [1, 1]} : vector<32x128xf32> to vector<1x128xf32>
    %111 = arith.select %30, %109, %110 : vector<1x128xi1>, vector<1x128xf32>
    %c1_37 = arith.constant 1 : index
    %c384_38 = arith.constant 384 : index
    %112 = vector.load %arg9[%c1_37, %c384_38] : memref<2x2048xf32, #tpu.memory_space<vmem>>, vector<1x128xf32>
    tpu.vector_store %arg9[%c1_37, %c384_38], %111 {strides = array<i32>} : memref<2x2048xf32, #tpu.memory_space<vmem>>, vector<1x128xf32>,
    %113 = vector.extract_strided_slice %96 {offsets = [8, 0], sizes = [1, 128], strides = [1, 1]} : vector<32x128xf32> to vector<1x128xf32>
    %114 = vector.extract_strided_slice %27 {offsets = [9, 0], sizes = [1, 128], strides = [1, 1]} : vector<32x128xf32> to vector<1x128xf32>
    %115 = arith.select %30, %113, %114 : vector<1x128xi1>, vector<1x128xf32>
    %c1_39 = arith.constant 1 : index
    %c512_40 = arith.constant 512 : index
    %116 = vector.load %arg9[%c1_39, %c512_40] : memref<2x2048xf32, #tpu.memory_space<vmem>>, vector<1x128xf32>
    tpu.vector_store %arg9[%c1_39, %c512_40], %115 {strides = array<i32>} : memref<2x2048xf32, #tpu.memory_space<vmem>>, vector<1x128xf32>,
    %117 = vector.extract_strided_slice %96 {offsets = [10, 0], sizes = [1, 128], strides = [1, 1]} : vector<32x128xf32> to vector<1x128xf32>
    %118 = vector.extract_strided_slice %27 {offsets = [11, 0], sizes = [1, 128], strides = [1, 1]} : vector<32x128xf32> to vector<1x128xf32>
    %119 = arith.select %30, %117, %118 : vector<1x128xi1>, vector<1x128xf32>
    %c1_41 = arith.constant 1 : index
    %c640_42 = arith.constant 640 : index
    %120 = vector.load %arg9[%c1_41, %c640_42] : memref<2x2048xf32, #tpu.memory_space<vmem>>, vector<1x128xf32>
    tpu.vector_store %arg9[%c1_41, %c640_42], %119 {strides = array<i32>} : memref<2x2048xf32, #tpu.memory_space<vmem>>, vector<1x128xf32>,
    %121 = vector.extract_strided_slice %96 {offsets = [12, 0], sizes = [1, 128], strides = [1, 1]} : vector<32x128xf32> to vector<1x128xf32>
    %122 = vector.extract_strided_slice %27 {offsets = [13, 0], sizes = [1, 128], strides = [1, 1]} : vector<32x128xf32> to vector<1x128xf32>
    %123 = arith.select %30, %121, %122 : vector<1x128xi1>, vector<1x128xf32>
    %c1_43 = arith.constant 1 : index
    %c768_44 = arith.constant 768 : index
    %124 = vector.load %arg9[%c1_43, %c768_44] : memref<2x2048xf32, #tpu.memory_space<vmem>>, vector<1x128xf32>
    tpu.vector_store %arg9[%c1_43, %c768_44], %123 {strides = array<i32>} : memref<2x2048xf32, #tpu.memory_space<vmem>>, vector<1x128xf32>,
    %125 = vector.extract_strided_slice %96 {offsets = [14, 0], sizes = [1, 128], strides = [1, 1]} : vector<32x128xf32> to vector<1x128xf32>
    %126 = vector.extract_strided_slice %27 {offsets = [15, 0], sizes = [1, 128], strides = [1, 1]} : vector<32x128xf32> to vector<1x128xf32>
    %127 = arith.select %30, %125, %126 : vector<1x128xi1>, vector<1x128xf32>
    %c1_45 = arith.constant 1 : index
    %c896_46 = arith.constant 896 : index
    %128 = vector.load %arg9[%c1_45, %c896_46] : memref<2x2048xf32, #tpu.memory_space<vmem>>, vector<1x128xf32>
    tpu.vector_store %arg9[%c1_45, %c896_46], %127 {strides = array<i32>} : memref<2x2048xf32, #tpu.memory_space<vmem>>, vector<1x128xf32>,
    %129 = vector.extract_strided_slice %96 {offsets = [16, 0], sizes = [1, 128], strides = [1, 1]} : vector<32x128xf32> to vector<1x128xf32>
    %130 = vector.extract_strided_slice %27 {offsets = [17, 0], sizes = [1, 128], strides = [1, 1]} : vector<32x128xf32> to vector<1x128xf32>
    %131 = arith.select %30, %129, %130 : vector<1x128xi1>, vector<1x128xf32>
    %c1_47 = arith.constant 1 : index
    %c1024_48 = arith.constant 1024 : index
    %132 = vector.load %arg9[%c1_47, %c1024_48] : memref<2x2048xf32, #tpu.memory_space<vmem>>, vector<1x128xf32>
    tpu.vector_store %arg9[%c1_47, %c1024_48], %131 {strides = array<i32>} : memref<2x2048xf32, #tpu.memory_space<vmem>>, vector<1x128xf32>,
    %133 = vector.extract_strided_slice %96 {offsets = [18, 0], sizes = [1, 128], strides = [1, 1]} : vector<32x128xf32> to vector<1x128xf32>
    %134 = vector.extract_strided_slice %27 {offsets = [19, 0], sizes = [1, 128], strides = [1, 1]} : vector<32x128xf32> to vector<1x128xf32>
    %135 = arith.select %30, %133, %134 : vector<1x128xi1>, vector<1x128xf32>
    %c1_49 = arith.constant 1 : index
    %c1152_50 = arith.constant 1152 : index
    %136 = vector.load %arg9[%c1_49, %c1152_50] : memref<2x2048xf32, #tpu.memory_space<vmem>>, vector<1x128xf32>
    tpu.vector_store %arg9[%c1_49, %c1152_50], %135 {strides = array<i32>} : memref<2x2048xf32, #tpu.memory_space<vmem>>, vector<1x128xf32>,
    %137 = vector.extract_strided_slice %96 {offsets = [20, 0], sizes = [1, 128], strides = [1, 1]} : vector<32x128xf32> to vector<1x128xf32>
    %138 = vector.extract_strided_slice %27 {offsets = [21, 0], sizes = [1, 128], strides = [1, 1]} : vector<32x128xf32> to vector<1x128xf32>
    %139 = arith.select %30, %137, %138 : vector<1x128xi1>, vector<1x128xf32>
    %c1_51 = arith.constant 1 : index
    %c1280_52 = arith.constant 1280 : index
    %140 = vector.load %arg9[%c1_51, %c1280_52] : memref<2x2048xf32, #tpu.memory_space<vmem>>, vector<1x128xf32>
    tpu.vector_store %arg9[%c1_51, %c1280_52], %139 {strides = array<i32>} : memref<2x2048xf32, #tpu.memory_space<vmem>>, vector<1x128xf32>,
    %141 = vector.extract_strided_slice %96 {offsets = [22, 0], sizes = [1, 128], strides = [1, 1]} : vector<32x128xf32> to vector<1x128xf32>
    %142 = vector.extract_strided_slice %27 {offsets = [23, 0], sizes = [1, 128], strides = [1, 1]} : vector<32x128xf32> to vector<1x128xf32>
    %143 = arith.select %30, %141, %142 : vector<1x128xi1>, vector<1x128xf32>
    %c1_53 = arith.constant 1 : index
    %c1408_54 = arith.constant 1408 : index
    %144 = vector.load %arg9[%c1_53, %c1408_54] : memref<2x2048xf32, #tpu.memory_space<vmem>>, vector<1x128xf32>
    tpu.vector_store %arg9[%c1_53, %c1408_54], %143 {strides = array<i32>} : memref<2x2048xf32, #tpu.memory_space<vmem>>, vector<1x128xf32>,
    %145 = vector.extract_strided_slice %96 {offsets = [24, 0], sizes = [1, 128], strides = [1, 1]} : vector<32x128xf32> to vector<1x128xf32>
    %146 = vector.extract_strided_slice %27 {offsets = [25, 0], sizes = [1, 128], strides = [1, 1]} : vector<32x128xf32> to vector<1x128xf32>
    %147 = arith.select %30, %145, %146 : vector<1x128xi1>, vector<1x128xf32>
    %c1_55 = arith.constant 1 : index
    %c1536_56 = arith.constant 1536 : index
    %148 = vector.load %arg9[%c1_55, %c1536_56] : memref<2x2048xf32, #tpu.memory_space<vmem>>, vector<1x128xf32>
    tpu.vector_store %arg9[%c1_55, %c1536_56], %147 {strides = array<i32>} : memref<2x2048xf32, #tpu.memory_space<vmem>>, vector<1x128xf32>,
    %149 = vector.extract_strided_slice %96 {offsets = [26, 0], sizes = [1, 128], strides = [1, 1]} : vector<32x128xf32> to vector<1x128xf32>
    %150 = vector.extract_strided_slice %27 {offsets = [27, 0], sizes = [1, 128], strides = [1, 1]} : vector<32x128xf32> to vector<1x128xf32>
    %151 = arith.select %30, %149, %150 : vector<1x128xi1>, vector<1x128xf32>
    %c1_57 = arith.constant 1 : index
    %c1664_58 = arith.constant 1664 : index
    %152 = vector.load %arg9[%c1_57, %c1664_58] : memref<2x2048xf32, #tpu.memory_space<vmem>>, vector<1x128xf32>
    tpu.vector_store %arg9[%c1_57, %c1664_58], %151 {strides = array<i32>} : memref<2x2048xf32, #tpu.memory_space<vmem>>, vector<1x128xf32>,
    %153 = vector.extract_strided_slice %96 {offsets = [28, 0], sizes = [1, 128], strides = [1, 1]} : vector<32x128xf32> to vector<1x128xf32>
    %154 = vector.extract_strided_slice %27 {offsets = [29, 0], sizes = [1, 128], strides = [1, 1]} : vector<32x128xf32> to vector<1x128xf32>
    %155 = arith.select %30, %153, %154 : vector<1x128xi1>, vector<1x128xf32>
    %c1_59 = arith.constant 1 : index
    %c1792_60 = arith.constant 1792 : index
    %156 = vector.load %arg9[%c1_59, %c1792_60] : memref<2x2048xf32, #tpu.memory_space<vmem>>, vector<1x128xf32>
    tpu.vector_store %arg9[%c1_59, %c1792_60], %155 {strides = array<i32>} : memref<2x2048xf32, #tpu.memory_space<vmem>>, vector<1x128xf32>,
    %157 = vector.extract_strided_slice %96 {offsets = [30, 0], sizes = [1, 128], strides = [1, 1]} : vector<32x128xf32> to vector<1x128xf32>
    %158 = vector.extract_strided_slice %27 {offsets = [31, 0], sizes = [1, 128], strides = [1, 1]} : vector<32x128xf32> to vector<1x128xf32>
    %159 = arith.select %30, %157, %158 : vector<1x128xi1>, vector<1x128xf32>
    %c1_61 = arith.constant 1 : index
    %c1920_62 = arith.constant 1920 : index
    %160 = vector.load %arg9[%c1_61, %c1920_62] : memref<2x2048xf32, #tpu.memory_space<vmem>>, vector<1x128xf32>
    tpu.vector_store %arg9[%c1_61, %c1920_62], %159 {strides = array<i32>} : memref<2x2048xf32, #tpu.memory_space<vmem>>, vector<1x128xf32>,
    %c0_63 = arith.constant 0 : index
    %c0_64 = arith.constant 0 : index
    %161 = vector.load %arg9[%c0_63, %c0_64] : memref<2x2048xf32, #tpu.memory_space<vmem>>, vector<2x2048xf32>
    %162 = arith.truncf %161 : vector<2x2048xf32> to vector<2x2048xbf16>
    %c0_65 = arith.constant 0 : index
    %c0_66 = arith.constant 0 : index
    %163 = vector.load %arg4[%c0_65, %c0_66] : memref<2048x128xbf16, #tpu.memory_space<vmem>>, vector<2048x128xbf16>
    %cst_67 = arith.constant dense<0.000000e+00> : vector<2x128xf32>
    %164 = tpu.matmul %162, %163, %cst_67 {dimension_numbers = #tpu.dot_dimension_numbers<[1], [0], [0], [1], [0, 0, 1, 1], [], []>} : vector<2x2048xbf16>, vector<2048x128xbf16>, vector<2x128xf32> -> vector<2x128xf32>
    %c0_68 = arith.constant 0 : index
    %c0_69 = arith.constant 0 : index
    %165 = vector.load %arg5[%c0_68, %c0_69] : memref<1x128xf32, #tpu.memory_space<vmem>>, vector<1x128xf32>
    %166 = vector.broadcast %165 : vector<1x128xf32> to vector<2x128xf32>
    %167 = arith.addf %164, %166 : vector<2x128xf32>
    %cst_70 = arith.constant 0.000000e+00 : f32
    %168 = vector.broadcast %cst_70 : f32 to vector<2x128xf32>
    %169 = arith.maximumf %167, %168 : vector<2x128xf32>
    %c0_71 = arith.constant 0 : index
    %c0_72 = arith.constant 0 : index
    %170 = vector.load %arg6[%c0_71, %c0_72] : memref<1x128xf32, #tpu.memory_space<vmem>>, vector<1x128xf32>
    %171 = vector.broadcast %170 : vector<1x128xf32> to vector<2x128xf32>
    %172 = arith.mulf %169, %171 : vector<2x128xf32>
    %cst_73 = arith.constant dense<0.000000e+00> : vector<2xf32>
    %173 = vector.multi_reduction <add>, %172, %cst_73 [1] : vector<2x128xf32> to vector<2xf32>
    %174 = vector.shape_cast %173 : vector<2xf32> to vector<2x1xf32>
    %c0_74 = arith.constant 0 : index
    %c0_75 = arith.constant 0 : index
    %175 = vector.load %arg7[%c0_74, %c0_75] : memref<1x1xf32, #tpu.memory_space<vmem>>, vector<1x1xf32>
    %176 = vector.broadcast %175 : vector<1x1xf32> to vector<2x1xf32>
    %177 = arith.addf %174, %176 : vector<2x1xf32>
    %c0_76 = arith.constant 0 : index
    %c0_77 = arith.constant 0 : index
    %178 = vector.load %arg8[%c0_76, %c0_77] : memref<2x1xf32, #tpu.memory_space<vmem>>, vector<2x1xf32>
    tpu.vector_store %arg8[%c0_76, %c0_77], %177 {strides = array<i32>} : memref<2x1xf32, #tpu.memory_space<vmem>>, vector<2x1xf32>,
    return
  }
}

</mosaic_0001>

<llo_original>
// kernel: chess_elo_head_forward.1
$region0: #{chess_elo_head_forward.1}
  #allocation0 [shape = 'u32[]', space=smem, size = 0x4, offset = 0x4, fixed_abs, tag = 'smem constant byte address 0x4 - core index']
  #allocation1 [shape = 'u32[72,128]{1,0:T(1,128)}', space=vmem, size = 0x9000, scoped, tag = 'internal scratch']
  #allocation2 [shape = 'f32[2,2048]{1,0:T(2,128)}', space=vmem, size = 0x4000, scoped, tag = 'scratch operand']
  #allocation3 [shape = 'f32[1,1]{1,0:T(1,128)S(1)}', space=vmem, size = 0x200, scoped, tag = 'scoped memory for chess_elo_head_forward.1']
  %s0 = inlined_call_operand.vmem [shape: f32[72,128], index: 0, kind: input, shape index: {}]
  %s1 = inlined_call_operand.vmem [shape: f32[32,72], index: 1, kind: input, shape index: {}]
  %s2 = inlined_call_operand.vmem [shape: f32[32,1], index: 2, kind: input, shape index: {}]
  %s3 = inlined_call_operand.vmem [shape: f32[32,1], index: 3, kind: input, shape index: {}]
  %s4 = inlined_call_operand.vmem [shape: bf16[2048,128], index: 4, kind: input, shape index: {}]
  %s5 = inlined_call_operand.vmem [shape: f32[1,128], index: 5, kind: input, shape index: {}]
  %s6 = inlined_call_operand.vmem [shape: f32[1,128], index: 6, kind: input, shape index: {}]
  %s7 = inlined_call_operand.<no memory space> [shape: f32[1,1], index: 7, kind: input, shape index: {}]
  %s8 = inlined_call_operand.vmem [shape: f32[2,1], index: 8, kind: output, shape index: {}]
  %s9 = sld [smem:[#allocation0]]
  $region42: #{chess_elo_head_forward.1} parent=0
    _
  %s11 = ssub.s32 1, %s9
  %s12 = scalar_select 0, %s11, %s9
  %v13 = vstv %s7
  %14 = vst [vmem:[#allocation3] sm:$0x1] %v13
  // Predicated region
  $region2: #{chess_elo_head_forward.1} parent=0 // pred_check
    _
  $region3: #{chess_elo_head_forward.1} parent=0 // pred_check_branch
    %16 = sbr.rel (0) target = $region5
  $region4: #{chess_elo_head_forward.1} parent=0 // pred_region
    _
  $region5: #{chess_elo_head_forward.1} parent=0 // pred_fallthru
    _
  // Predicated region
  $region6: #{chess_elo_head_forward.1} parent=0 // pred_check
    _
  $region7: #{chess_elo_head_forward.1} parent=0 // pred_check_branch
    %18 = sbr.rel (0) target = $region9
  $region8: #{chess_elo_head_forward.1} parent=0 // pred_region
    _
  $region9: #{chess_elo_head_forward.1} parent=0 // pred_fallthru
    _
  // Predicated region
  $region10: #{chess_elo_head_forward.1} parent=0 // pred_check
    _
  $region11: #{chess_elo_head_forward.1} parent=0 // pred_check_branch
    %20 = sbr.rel (0) target = $region13
  $region12: #{chess_elo_head_forward.1} parent=0 // pred_region
    _
  $region13: #{chess_elo_head_forward.1} parent=0 // pred_fallthru
    _
  // Predicated region
  $region14: #{chess_elo_head_forward.1} parent=0 // pred_check
    _
  $region15: #{chess_elo_head_forward.1} parent=0 // pred_check_branch
    %22 = sbr.rel (0) target = $region17
  $region16: #{chess_elo_head_forward.1} parent=0 // pred_region
    _
  $region17: #{chess_elo_head_forward.1} parent=0 // pred_fallthru
    _
  // Predicated region
  $region18: #{chess_elo_head_forward.1} parent=0 // pred_check
    _
  $region19: #{chess_elo_head_forward.1} parent=0 // pred_check_branch
    %24 = sbr.rel (0) target = $region21
  $region20: #{chess_elo_head_forward.1} parent=0 // pred_region
    _
  $region21: #{chess_elo_head_forward.1} parent=0 // pred_fallthru
    _
  // Predicated region
  $region22: #{chess_elo_head_forward.1} parent=0 // pred_check
    _
  $region23: #{chess_elo_head_forward.1} parent=0 // pred_check_branch
    %26 = sbr.rel (0) target = $region25
  $region24: #{chess_elo_head_forward.1} parent=0 // pred_region
    _
  $region25: #{chess_elo_head_forward.1} parent=0 // pred_fallthru
    _
  // Predicated region
  $region26: #{chess_elo_head_forward.1} parent=0 // pred_check
    _
  $region27: #{chess_elo_head_forward.1} parent=0 // pred_check_branch
    %28 = sbr.rel (0) target = $region29
  $region28: #{chess_elo_head_forward.1} parent=0 // pred_region
    _
  $region29: #{chess_elo_head_forward.1} parent=0 // pred_fallthru
    _
  // Predicated region
  $region30: #{chess_elo_head_forward.1} parent=0 // pred_check
    _
  $region31: #{chess_elo_head_forward.1} parent=0 // pred_check_branch
    %30 = sbr.rel (0) target = $region33
  $region32: #{chess_elo_head_forward.1} parent=0 // pred_region
    _
  $region33: #{chess_elo_head_forward.1} parent=0 // pred_fallthru
    _
  %v31 = vld [vmem:[%s1] sm:$0xff]
  %v32 = vld [vmem:[%s1 + $0x8] sm:$0xff]
  %v33 = vld [vmem:[%s1 + $0x10] sm:$0xff]
  %v34 = vld [vmem:[%s1 + $0x18] sm:$0xff]
  %v35 = vld [vmem:[%s0] sm:$0xff]
  %v36 = vld [vmem:[%s0 + $0x8] sm:$0xff]
  %v37 = vld [vmem:[%s0 + $0x10] sm:$0xff]
  %v38 = vld [vmem:[%s0 + $0x18] sm:$0xff]
  %v39 = vld [vmem:[%s0 + $0x20] sm:$0xff]
  %v40 = vld [vmem:[%s0 + $0x28] sm:$0xff]
  %v41 = vld [vmem:[%s0 + $0x30] sm:$0xff]
  %v42 = vld [vmem:[%s0 + $0x38] sm:$0xff]
  %v43 = vld [vmem:[%s0 + $0x40] sm:$0xff]
  %vm44 = vcmask 588800
  %v46 = vsel %vm44, %v31, 0
  %v49 = vsel %vm44, %v32, 0
  %v52 = vsel %vm44, %v33, 0
  %v55 = vsel %vm44, %v34, 0
  %57 = vmatpush.msra.mxu0 0.0
  %58 = vmatpush.msra.mxu0 0.0
  %59 = vmatpush.msra.mxu0 0.0
  %60 = vmatpush.msra.mxu0 0.0
  %61 = vmatpush.msra.mxu0 0.0
  %62 = vmatpush.msra.mxu0 0.0
  %63 = vmatpush.msra.mxu0 0.0
  %64 = vmatpush.msra.mxu0 %v43
  %65 = vmatpush.msra.mxu0 %v42
  %66 = vmatpush.msra.mxu0 %v41
  %67 = vmatpush.msra.mxu0 %v40
  %68 = vmatpush.msra.mxu0 %v39
  %69 = vmatpush.msra.mxu0 %v38
  %70 = vmatpush.msra.mxu0 %v37
  %71 = vmatpush.msra.mxu0 %v36
  %72 = vmatpush.msra.mxu0 %v35
  %73 = vmatmul.f32.gmra.mxu0 %v46
  %v74 = vpop.f32.mrf.mxu0
  %v75 = vadd.f32 0.0, %v74
  %76 = vmatmul.f32.gmra.mxu0 %v49
  %v77 = vpop.f32.mrf.mxu0
  %v78 = vadd.f32 0.0, %v77
  %79 = vmatmul.f32.gmra.mxu0 %v52
  %v80 = vpop.f32.mrf.mxu0
  %v81 = vadd.f32 0.0, %v80
  %82 = vmatmul.f32.gmra.mxu0 %v55
  %v83 = vpop.f32.mrf.mxu0
  %v84 = vadd.f32 0.0, %v83
  %85 = vdwg.mxu0
  %86 = vadd.xlane.f32.xlu0 %v75
  %v87 = vpop.xlane.xlu0 %86
  %88 = vadd.xlane.f32.xlu0 %v78
  %v89 = vpop.xlane.xlu0 %88
  %90 = vadd.xlane.f32.xlu0 %v81
  %v91 = vpop.xlane.xlu0 %90
  %92 = vadd.xlane.f32.xlu0 %v84
  %v93 = vpop.xlane.xlu0 %92
  %v94 = vmul.f32 %v75, %v75
  %v95 = vmul.f32 %v78, %v78
  %v96 = vmul.f32 %v81, %v81
  %v97 = vmul.f32 %v84, %v84
  %98 = vadd.xlane.f32.xlu0 %v94
  %v99 = vpop.xlane.xlu0 %98
  %100 = vadd.xlane.f32.xlu0 %v95
  %v101 = vpop.xlane.xlu0 %100
  %102 = vadd.xlane.f32.xlu0 %v96
  %v103 = vpop.xlane.xlu0 %102
  %104 = vadd.xlane.f32.xlu0 %v97
  %v105 = vpop.xlane.xlu0 %104
  %v106 = vmul.f32 %v87, 0.0078125
  %v107 = vmul.f32 %v89, 0.0078125
  %v108 = vmul.f32 %v91, 0.0078125
  %v109 = vmul.f32 %v93, 0.0078125
  %v110 = vmul.f32 %v99, 0.0078125
  %v111 = vmul.f32 %v101, 0.0078125
  %v112 = vmul.f32 %v103, 0.0078125
  %v113 = vmul.f32 %v105, 0.0078125
  %v114 = vmul.f32 %v106, %v106
  %v115 = vmul.f32 %v107, %v107
  %v116 = vmul.f32 %v108, %v108
  %v117 = vmul.f32 %v109, %v109
  %v118 = vsub.f32 %v110, %v114
  %v119 = vsub.f32 %v111, %v115
  %v120 = vsub.f32 %v112, %v116
  %v121 = vsub.f32 %v113, %v117
  %v122 = vadd.f32 %v118, 1e-05
  %v123 = vadd.f32 %v119, 1e-05
  %v124 = vadd.f32 %v120, 1e-05
  %v125 = vadd.f32 %v121, 1e-05
  %v126 = vrsqrt.pop %v122
  %v127 = vmul.f32 %v126, %v122
  %v128 = vmul.f32 %v127, %v126
  %v129 = vmul.f32 0.5, %v128
  %v130 = vsub.f32 1.5, %v129
  %v131 = vmul.f32 %v126, %v130
  %vm132 = vweird.f32 %v122
  %vm133 = vweird.f32 %v126
  %vm134 = vmor %vm132, %vm133
  %v135 = vsel %vm134, %v126, %v131
  %v136 = vrsqrt.pop %v123
  %v137 = vmul.f32 %v136, %v123
  %v138 = vmul.f32 %v137, %v136
  %v139 = vmul.f32 0.5, %v138
  %v140 = vsub.f32 1.5, %v139
  %v141 = vmul.f32 %v136, %v140
  %vm142 = vweird.f32 %v123
  %vm143 = vweird.f32 %v136
  %vm144 = vmor %vm142, %vm143
  %v145 = vsel %vm144, %v136, %v141
  %v146 = vrsqrt.pop %v124
  %v147 = vmul.f32 %v146, %v124
  %v148 = vmul.f32 %v147, %v146
  %v149 = vmul.f32 0.5, %v148
  %v150 = vsub.f32 1.5, %v149
  %v151 = vmul.f32 %v146, %v150
  %vm152 = vweird.f32 %v124
  %vm153 = vweird.f32 %v146
  %vm154 = vmor %vm152, %vm153
  %v155 = vsel %vm154, %v146, %v151
  %v156 = vrsqrt.pop %v125
  %v157 = vmul.f32 %v156, %v125
  %v158 = vmul.f32 %v157, %v156
  %v159 = vmul.f32 0.5, %v158
  %v160 = vsub.f32 1.5, %v159
  %v161 = vmul.f32 %v156, %v160
  %vm162 = vweird.f32 %v125
  %vm163 = vweird.f32 %v156
  %vm164 = vmor %vm162, %vm163
  %v165 = vsel %vm164, %v156, %v161
  %v166 = vld [vmem:[%s2] sm:$0xff]
  %v167 = vld [vmem:[%s2 + $0x8] sm:$0xff]
  %v168 = vld [vmem:[%s2 + $0x10] sm:$0xff]
  %v169 = vld [vmem:[%s2 + $0x18] sm:$0xff]
  %v170 = vmul.f32 %v135, %v166
  %v171 = vmul.f32 %v145, %v167
  %v172 = vmul.f32 %v155, %v168
  %v173 = vmul.f32 %v165, %v169
  %v174 = vld [vmem:[%s3] sm:$0xff]
  %v175 = vld [vmem:[%s3 + $0x8] sm:$0xff]
  %v176 = vld [vmem:[%s3 + $0x10] sm:$0xff]
  %v177 = vld [vmem:[%s3 + $0x18] sm:$0xff]
  %v178 = vmul.f32 %v106, %v170
  %v179 = vmul.f32 %v107, %v171
  %v180 = vmul.f32 %v108, %v172
  %v181 = vmul.f32 %v109, %v173
  %v182 = vsub.f32 %v174, %v178
  %v183 = vsub.f32 %v175, %v179
  %v184 = vsub.f32 %v176, %v180
  %v185 = vsub.f32 %v177, %v181
  %187 = vset.pattern.permute.xlu0 0
  %188 = vperm.xlu0 %187, %v170
  %v189 = vpop.permute.xlu0 %188
  %192 = vset.pattern.permute.xlu0 0
  %193 = vperm.xlu0 %192, %v171
  %v194 = vpop.permute.xlu0 %193
  %197 = vset.pattern.permute.xlu0 0
  %198 = vperm.xlu0 %197, %v172
  %v199 = vpop.permute.xlu0 %198
  %202 = vset.pattern.permute.xlu0 0
  %203 = vperm.xlu0 %202, %v173
  %v204 = vpop.permute.xlu0 %203
  %v206 = vmul.f32 %v75, %v189
  %v207 = vmul.f32 %v78, %v194
  %v208 = vmul.f32 %v81, %v199
  %v209 = vmul.f32 %v84, %v204
  %211 = vset.pattern.permute.xlu0 0
  %212 = vperm.xlu0 %211, %v182
  %v213 = vpop.permute.xlu0 %212
  %216 = vset.pattern.permute.xlu0 0
  %217 = vperm.xlu0 %216, %v183
  %v218 = vpop.permute.xlu0 %217
  %221 = vset.pattern.permute.xlu0 0
  %222 = vperm.xlu0 %221, %v184
  %v223 = vpop.permute.xlu0 %222
  %226 = vset.pattern.permute.xlu0 0
  %227 = vperm.xlu0 %226, %v185
  %v228 = vpop.permute.xlu0 %227
  %v230 = vadd.f32 %v206, %v213
  %v231 = vadd.f32 %v207, %v218
  %v232 = vadd.f32 %v208, %v223
  %v233 = vadd.f32 %v209, %v228
  %v234 = vmax.f32 %v230, 0.0
  %v235 = vmax.f32 %v231, 0.0
  %v236 = vmax.f32 %v232, 0.0
  %v237 = vmax.f32 %v233, 0.0
  %v238 = vlaneseq
  %v239 = vand.u32 %v238, 127
  %vm240 = vcmp.lt.s32.totalorder %v239, 64
  %241 = vrot.lane.b32.xlu0 %v234, 64
  %v242 = vpop.permute.xlu0 %241
  %243 = vrot.lane.b32.xlu0 %v235, 64
  %v244 = vpop.permute.xlu0 %243
  %245 = vrot.lane.b32.xlu0 %v236, 64
  %v246 = vpop.permute.xlu0 %245
  %247 = vrot.lane.b32.xlu0 %v237, 64
  %v248 = vpop.permute.xlu0 %247
  %v250 = vrot.slane %v242, 1
  %v252 = vsel %vm240, %v234, %v250
  %253 = vst [vmem:[#allocation2] sm:$0x1] %v252
  %255 = vst.sshfl [vmem:[#allocation1] sm:$0xff pattern:$0x73625140] %v252
  %s256 = scalar_lea.vmem [#allocation1], 1
  %v257 = vld [vmem:[%s256] ss:$4 sm:$0xff]
  %259 = vst [vmem:[#allocation2 + $0x2] sm:$0x1] %v257
  %260 = vst.sshfl [vmem:[#allocation1] sm:$0xff pattern:$0x73625140] %v252
  %s261 = scalar_lea.vmem [#allocation1], 2
  %v262 = vld [vmem:[%s261] ss:$4 sm:$0xff]
  %264 = vst [vmem:[#allocation2 + $0x4] sm:$0x1] %v262
  %265 = vst.sshfl [vmem:[#allocation1] sm:$0xff pattern:$0x73625140] %v252
  %s266 = scalar_lea.vmem [#allocation1], 3
  %v267 = vld [vmem:[%s266] ss:$4 sm:$0xff]
  %269 = vst [vmem:[#allocation2 + $0x6] sm:$0x1] %v267
  %v271 = vrot.slane %v244, 1
  %v273 = vsel %vm240, %v235, %v271
  %274 = vst [vmem:[#allocation2 + $0x8] sm:$0x1] %v273
  %276 = vst.sshfl [vmem:[#allocation1] sm:$0xff pattern:$0x73625140] %v273
  %s277 = scalar_lea.vmem [#allocation1], 1
  %v278 = vld [vmem:[%s277] ss:$4 sm:$0xff]
  %280 = vst [vmem:[#allocation2 + $0xa] sm:$0x1] %v278
  %281 = vst.sshfl [vmem:[#allocation1] sm:$0xff pattern:$0x73625140] %v273
  %s282 = scalar_lea.vmem [#allocation1], 2
  %v283 = vld [vmem:[%s282] ss:$4 sm:$0xff]
  %285 = vst [vmem:[#allocation2 + $0xc] sm:$0x1] %v283
  %286 = vst.sshfl [vmem:[#allocation1] sm:$0xff pattern:$0x73625140] %v273
  %s287 = scalar_lea.vmem [#allocation1], 3
  %v288 = vld [vmem:[%s287] ss:$4 sm:$0xff]
  %290 = vst [vmem:[#allocation2 + $0xe] sm:$0x1] %v288
  %v292 = vrot.slane %v246, 1
  %v294 = vsel %vm240, %v236, %v292
  %295 = vst [vmem:[#allocation2 + $0x10] sm:$0x1] %v294
  %297 = vst.sshfl [vmem:[#allocation1] sm:$0xff pattern:$0x73625140] %v294
  %s298 = scalar_lea.vmem [#allocation1], 1
  %v299 = vld [vmem:[%s298] ss:$4 sm:$0xff]
  %301 = vst [vmem:[#allocation2 + $0x12] sm:$0x1] %v299
  %302 = vst.sshfl [vmem:[#allocation1] sm:$0xff pattern:$0x73625140] %v294
  %s303 = scalar_lea.vmem [#allocation1], 2
  %v304 = vld [vmem:[%s303] ss:$4 sm:$0xff]
  %306 = vst [vmem:[#allocation2 + $0x14] sm:$0x1] %v304
  %307 = vst.sshfl [vmem:[#allocation1] sm:$0xff pattern:$0x73625140] %v294
  %s308 = scalar_lea.vmem [#allocation1], 3
  %v309 = vld [vmem:[%s308] ss:$4 sm:$0xff]
  %311 = vst [vmem:[#allocation2 + $0x16] sm:$0x1] %v309
  %v313 = vrot.slane %v248, 1
  %v315 = vsel %vm240, %v237, %v313
  %316 = vst [vmem:[#allocation2 + $0x18] sm:$0x1] %v315
  %318 = vst.sshfl [vmem:[#allocation1] sm:$0xff pattern:$0x73625140] %v315
  %s319 = scalar_lea.vmem [#allocation1], 1
  %v320 = vld [vmem:[%s319] ss:$4 sm:$0xff]
  %322 = vst [vmem:[#allocation2 + $0x1a] sm:$0x1] %v320
  %323 = vst.sshfl [vmem:[#allocation1] sm:$0xff pattern:$0x73625140] %v315
  %s324 = scalar_lea.vmem [#allocation1], 2
  %v325 = vld [vmem:[%s324] ss:$4 sm:$0xff]
  %327 = vst [vmem:[#allocation2 + $0x1c] sm:$0x1] %v325
  %328 = vst.sshfl [vmem:[#allocation1] sm:$0xff pattern:$0x73625140] %v315
  %s329 = scalar_lea.vmem [#allocation1], 3
  %v330 = vld [vmem:[%s329] ss:$4 sm:$0xff]
  %332 = vst [vmem:[#allocation2 + $0x1e] sm:$0x1] %v330
  %v334 = vrot.slane %v234, 1
  %v336 = vsel %vm240, %v242, %v334
  %337 = vst [vmem:[#allocation2 + $0x1] sm:$0x1] %v336
  %339 = vst.sshfl [vmem:[#allocation1] sm:$0xff pattern:$0x73625140] %v336
  %s340 = scalar_lea.vmem [#allocation1], 1
  %v341 = vld [vmem:[%s340] ss:$4 sm:$0xff]
  %343 = vst [vmem:[#allocation2 + $0x3] sm:$0x1] %v341
  %344 = vst.sshfl [vmem:[#allocation1] sm:$0xff pattern:$0x73625140] %v336
  %s345 = scalar_lea.vmem [#allocation1], 2
  %v346 = vld [vmem:[%s345] ss:$4 sm:$0xff]
  %348 = vst [vmem:[#allocation2 + $0x5] sm:$0x1] %v346
  %349 = vst.sshfl [vmem:[#allocation1] sm:$0xff pattern:$0x73625140] %v336
  %s350 = scalar_lea.vmem [#allocation1], 3
  %v351 = vld [vmem:[%s350] ss:$4 sm:$0xff]
  %353 = vst [vmem:[#allocation2 + $0x7] sm:$0x1] %v351
  %v355 = vrot.slane %v235, 1
  %v357 = vsel %vm240, %v244, %v355
  %358 = vst [vmem:[#allocation2 + $0x9] sm:$0x1] %v357
  %360 = vst.sshfl [vmem:[#allocation1] sm:$0xff pattern:$0x73625140] %v357
  %s361 = scalar_lea.vmem [#allocation1], 1
  %v362 = vld [vmem:[%s361] ss:$4 sm:$0xff]
  %364 = vst [vmem:[#allocation2 + $0xb] sm:$0x1] %v362
  %365 = vst.sshfl [vmem:[#allocation1] sm:$0xff pattern:$0x73625140] %v357
  %s366 = scalar_lea.vmem [#allocation1], 2
  %v367 = vld [vmem:[%s366] ss:$4 sm:$0xff]
  %369 = vst [vmem:[#allocation2 + $0xd] sm:$0x1] %v367
  %370 = vst.sshfl [vmem:[#allocation1] sm:$0xff pattern:$0x73625140] %v357
  %s371 = scalar_lea.vmem [#allocation1], 3
  %v372 = vld [vmem:[%s371] ss:$4 sm:$0xff]
  %374 = vst [vmem:[#allocation2 + $0xf] sm:$0x1] %v372
  %v376 = vrot.slane %v236, 1
  %v378 = vsel %vm240, %v246, %v376
  %379 = vst [vmem:[#allocation2 + $0x11] sm:$0x1] %v378
  %381 = vst.sshfl [vmem:[#allocation1] sm:$0xff pattern:$0x73625140] %v378
  %s382 = scalar_lea.vmem [#allocation1], 1
  %v383 = vld [vmem:[%s382] ss:$4 sm:$0xff]
  %385 = vst [vmem:[#allocation2 + $0x13] sm:$0x1] %v383
  %386 = vst.sshfl [vmem:[#allocation1] sm:$0xff pattern:$0x73625140] %v378
  %s387 = scalar_lea.vmem [#allocation1], 2
  %v388 = vld [vmem:[%s387] ss:$4 sm:$0xff]
  %390 = vst [vmem:[#allocation2 + $0x15] sm:$0x1] %v388
  %391 = vst.sshfl [vmem:[#allocation1] sm:$0xff pattern:$0x73625140] %v378
  %s392 = scalar_lea.vmem [#allocation1], 3
  %v393 = vld [vmem:[%s392] ss:$4 sm:$0xff]
  %395 = vst [vmem:[#allocation2 + $0x17] sm:$0x1] %v393
  %v397 = vrot.slane %v237, 1
  %v399 = vsel %vm240, %v248, %v397
  %400 = vst [vmem:[#allocation2 + $0x19] sm:$0x1] %v399
  %402 = vst.sshfl [vmem:[#allocation1] sm:$0xff pattern:$0x73625140] %v399
  %s403 = scalar_lea.vmem [#allocation1], 1
  %v404 = vld [vmem:[%s403] ss:$4 sm:$0xff]
  %406 = vst [vmem:[#allocation2 + $0x1b] sm:$0x1] %v404
  %407 = vst.sshfl [vmem:[#allocation1] sm:$0xff pattern:$0x73625140] %v399
  %s408 = scalar_lea.vmem [#allocation1], 2
  %v409 = vld [vmem:[%s408] ss:$4 sm:$0xff]
  %411 = vst [vmem:[#allocation2 + $0x1d] sm:$0x1] %v409
  %412 = vst.sshfl [vmem:[#allocation1] sm:$0xff pattern:$0x73625140] %v399
  %s413 = scalar_lea.vmem [#allocation1], 3
  %v414 = vld [vmem:[%s413] ss:$4 sm:$0xff]
  %416 = vst [vmem:[#allocation2 + $0x1f] sm:$0x1] %v414
  %v417 = vld [vmem:[#allocation2] sm:$0xff]
  %v418 = vld [vmem:[#allocation2 + $0x8] sm:$0xff]
  %v419 = vld [vmem:[#allocation2 + $0x10] sm:$0xff]
  %v420 = vld [vmem:[#allocation2 + $0x18] sm:$0xff]
  %425 = vst [vmem:[#allocation1] ss:$4 sm:$0xff] %v417
  %s426 = scalar_lea.vmem [#allocation1], 32
  %427 = vst [vmem:[%s426] ss:$4 sm:$0xff] %v418
  %v428 = vld.sshfl [vmem:[#allocation1] sm:$0xff pattern:$0x73625140]
  %v429 = vld.sshfl [vmem:[#allocation1 + $0x8] sm:$0xff pattern:$0x73625140]
  %v430 = vld.sshfl [vmem:[#allocation1 + $0x10] sm:$0xff pattern:$0x73625140]
  %v431 = vld.sshfl [vmem:[#allocation1 + $0x18] sm:$0xff pattern:$0x73625140]
  %v432 = vld.sshfl [vmem:[#allocation1 + $0x20] sm:$0xff pattern:$0x73625140]
  %v433 = vld.sshfl [vmem:[#allocation1 + $0x28] sm:$0xff pattern:$0x73625140]
  %v434 = vld.sshfl [vmem:[#allocation1 + $0x30] sm:$0xff pattern:$0x73625140]
  %v435 = vld.sshfl [vmem:[#allocation1 + $0x38] sm:$0xff pattern:$0x73625140]
  %436 = vst [vmem:[#allocation1] ss:$4 sm:$0xff] %v419
  %437 = vst [vmem:[%s426] ss:$4 sm:$0xff] %v420
  %v438 = vld.sshfl [vmem:[#allocation1] sm:$0xff pattern:$0x73625140]
  %v439 = vld.sshfl [vmem:[#allocation1 + $0x8] sm:$0xff pattern:$0x73625140]
  %v440 = vld.sshfl [vmem:[#allocation1 + $0x10] sm:$0xff pattern:$0x73625140]
  %v441 = vld.sshfl [vmem:[#allocation1 + $0x18] sm:$0xff pattern:$0x73625140]
  %v442 = vld.sshfl [vmem:[#allocation1 + $0x20] sm:$0xff pattern:$0x73625140]
  %v443 = vld.sshfl [vmem:[#allocation1 + $0x28] sm:$0xff pattern:$0x73625140]
  %v444 = vld.sshfl [vmem:[#allocation1 + $0x30] sm:$0xff pattern:$0x73625140]
  %v445 = vld.sshfl [vmem:[#allocation1 + $0x38] sm:$0xff pattern:$0x73625140]
  %v462 = vpack.c.bf16 %v428, %v428
  %v463 = vpack.c.bf16 %v429, %v429
  %v464 = vpack.c.bf16 %v430, %v430
  %v465 = vpack.c.bf16 %v431, %v431
  %v466 = vpack.c.bf16 %v432, %v432
  %v467 = vpack.c.bf16 %v433, %v433
  %v468 = vpack.c.bf16 %v434, %v434
  %v469 = vpack.c.bf16 %v435, %v435
  %v470 = vpack.c.bf16 %v438, %v438
  %v471 = vpack.c.bf16 %v439, %v439
  %v472 = vpack.c.bf16 %v440, %v440
  %v473 = vpack.c.bf16 %v441, %v441
  %v474 = vpack.c.bf16 %v442, %v442
  %v475 = vpack.c.bf16 %v443, %v443
  %v476 = vpack.c.bf16 %v444, %v444
  %v477 = vpack.c.bf16 %v445, %v445
  %v478 = vld [vmem:[%s4] sm:$0xf]
  %v479 = vld [vmem:[%s4 + $0x4] sm:$0xf]
  %v480 = vld [vmem:[%s4 + $0x8] sm:$0xf]
  %v481 = vld [vmem:[%s4 + $0xc] sm:$0xf]
  %v482 = vld [vmem:[%s4 + $0x10] sm:$0xf]
  %v483 = vld [vmem:[%s4 + $0x14] sm:$0xf]
  %v484 = vld [vmem:[%s4 + $0x18] sm:$0xf]
  %v485 = vld [vmem:[%s4 + $0x1c] sm:$0xf]
  %v486 = vld [vmem:[%s4 + $0x20] sm:$0xf]
  %v487 = vld [vmem:[%s4 + $0x24] sm:$0xf]
  %v488 = vld [vmem:[%s4 + $0x28] sm:$0xf]
  %v489 = vld [vmem:[%s4 + $0x2c] sm:$0xf]
  %v490 = vld [vmem:[%s4 + $0x30] sm:$0xf]
  %v491 = vld [vmem:[%s4 + $0x34] sm:$0xf]
  %v492 = vld [vmem:[%s4 + $0x38] sm:$0xf]
  %v493 = vld [vmem:[%s4 + $0x3c] sm:$0xf]
  %v494 = vld [vmem:[%s4 + $0x40] sm:$0xf]
  %v495 = vld [vmem:[%s4 + $0x44] sm:$0xf]
  %v496 = vld [vmem:[%s4 + $0x48] sm:$0xf]
  %v497 = vld [vmem:[%s4 + $0x4c] sm:$0xf]
  %v498 = vld [vmem:[%s4 + $0x50] sm:$0xf]
  %v499 = vld [vmem:[%s4 + $0x54] sm:$0xf]
  %v500 = vld [vmem:[%s4 + $0x58] sm:$0xf]
  %v501 = vld [vmem:[%s4 + $0x5c] sm:$0xf]
  %v502 = vld [vmem:[%s4 + $0x60] sm:$0xf]
  %v503 = vld [vmem:[%s4 + $0x64] sm:$0xf]
  %v504 = vld [vmem:[%s4 + $0x68] sm:$0xf]
  %v505 = vld [vmem:[%s4 + $0x6c] sm:$0xf]
  %v506 = vld [vmem:[%s4 + $0x70] sm:$0xf]
  %v507 = vld [vmem:[%s4 + $0x74] sm:$0xf]
  %v508 = vld [vmem:[%s4 + $0x78] sm:$0xf]
  %v509 = vld [vmem:[%s4 + $0x7c] sm:$0xf]
  %v510 = vld [vmem:[%s4 + $0x80] sm:$0xf]
  %v511 = vld [vmem:[%s4 + $0x84] sm:$0xf]
  %v512 = vld [vmem:[%s4 + $0x88] sm:$0xf]
  %v513 = vld [vmem:[%s4 + $0x8c] sm:$0xf]
  %v514 = vld [vmem:[%s4 + $0x90] sm:$0xf]
  %v515 = vld [vmem:[%s4 + $0x94] sm:$0xf]
  %v516 = vld [vmem:[%s4 + $0x98] sm:$0xf]
  %v517 = vld [vmem:[%s4 + $0x9c] sm:$0xf]
  %v518 = vld [vmem:[%s4 + $0xa0] sm:$0xf]
  %v519 = vld [vmem:[%s4 + $0xa4] sm:$0xf]
  %v520 = vld [vmem:[%s4 + $0xa8] sm:$0xf]
  %v521 = vld [vmem:[%s4 + $0xac] sm:$0xf]
  %v522 = vld [vmem:[%s4 + $0xb0] sm:$0xf]
  %v523 = vld [vmem:[%s4 + $0xb4] sm:$0xf]
  %v524 = vld [vmem:[%s4 + $0xb8] sm:$0xf]
  %v525 = vld [vmem:[%s4 + $0xbc] sm:$0xf]
  %v526 = vld [vmem:[%s4 + $0xc0] sm:$0xf]
  %v527 = vld [vmem:[%s4 + $0xc4] sm:$0xf]
  %v528 = vld [vmem:[%s4 + $0xc8] sm:$0xf]
  %v529 = vld [vmem:[%s4 + $0xcc] sm:$0xf]
  %v530 = vld [vmem:[%s4 + $0xd0] sm:$0xf]
  %v531 = vld [vmem:[%s4 + $0xd4] sm:$0xf]
  %v532 = vld [vmem:[%s4 + $0xd8] sm:$0xf]
  %v533 = vld [vmem:[%s4 + $0xdc] sm:$0xf]
  %v534 = vld [vmem:[%s4 + $0xe0] sm:$0xf]
  %v535 = vld [vmem:[%s4 + $0xe4] sm:$0xf]
  %v536 = vld [vmem:[%s4 + $0xe8] sm:$0xf]
  %v537 = vld [vmem:[%s4 + $0xec] sm:$0xf]
  %v538 = vld [vmem:[%s4 + $0xf0] sm:$0xf]
  %v539 = vld [vmem:[%s4 + $0xf4] sm:$0xf]
  %v540 = vld [vmem:[%s4 + $0xf8] sm:$0xf]
  %v541 = vld [vmem:[%s4 + $0xfc] sm:$0xf]
  %v542 = vld [vmem:[%s4 + $0x100] sm:$0xf]
  %v543 = vld [vmem:[%s4 + $0x104] sm:$0xf]
  %v544 = vld [vmem:[%s4 + $0x108] sm:$0xf]
  %v545 = vld [vmem:[%s4 + $0x10c] sm:$0xf]
  %v546 = vld [vmem:[%s4 + $0x110] sm:$0xf]
  %v547 = vld [vmem:[%s4 + $0x114] sm:$0xf]
  %v548 = vld [vmem:[%s4 + $0x118] sm:$0xf]
  %v549 = vld [vmem:[%s4 + $0x11c] sm:$0xf]
  %v550 = vld [vmem:[%s4 + $0x120] sm:$0xf]
  %v551 = vld [vmem:[%s4 + $0x124] sm:$0xf]
  %v552 = vld [vmem:[%s4 + $0x128] sm:$0xf]
  %v553 = vld [vmem:[%s4 + $0x12c] sm:$0xf]
  %v554 = vld [vmem:[%s4 + $0x130] sm:$0xf]
  %v555 = vld [vmem:[%s4 + $0x134] sm:$0xf]
  %v556 = vld [vmem:[%s4 + $0x138] sm:$0xf]
  %v557 = vld [vmem:[%s4 + $0x13c] sm:$0xf]
  %v558 = vld [vmem:[%s4 + $0x140] sm:$0xf]
  %v559 = vld [vmem:[%s4 + $0x144] sm:$0xf]
  %v560 = vld [vmem:[%s4 + $0x148] sm:$0xf]
  %v561 = vld [vmem:[%s4 + $0x14c] sm:$0xf]
  %v562 = vld [vmem:[%s4 + $0x150] sm:$0xf]
  %v563 = vld [vmem:[%s4 + $0x154] sm:$0xf]
  %v564 = vld [vmem:[%s4 + $0x158] sm:$0xf]
  %v565 = vld [vmem:[%s4 + $0x15c] sm:$0xf]
  %v566 = vld [vmem:[%s4 + $0x160] sm:$0xf]
  %v567 = vld [vmem:[%s4 + $0x164] sm:$0xf]
  %v568 = vld [vmem:[%s4 + $0x168] sm:$0xf]
  %v569 = vld [vmem:[%s4 + $0x16c] sm:$0xf]
  %v570 = vld [vmem:[%s4 + $0x170] sm:$0xf]
  %v571 = vld [vmem:[%s4 + $0x174] sm:$0xf]
  %v572 = vld [vmem:[%s4 + $0x178] sm:$0xf]
  %v573 = vld [vmem:[%s4 + $0x17c] sm:$0xf]
  %v574 = vld [vmem:[%s4 + $0x180] sm:$0xf]
  %v575 = vld [vmem:[%s4 + $0x184] sm:$0xf]
  %v576 = vld [vmem:[%s4 + $0x188] sm:$0xf]
  %v577 = vld [vmem:[%s4 + $0x18c] sm:$0xf]
  %v578 = vld [vmem:[%s4 + $0x190] sm:$0xf]
  %v579 = vld [vmem:[%s4 + $0x194] sm:$0xf]
  %v580 = vld [vmem:[%s4 + $0x198] sm:$0xf]
  %v581 = vld [vmem:[%s4 + $0x19c] sm:$0xf]
  %v582 = vld [vmem:[%s4 + $0x1a0] sm:$0xf]
  %v583 = vld [vmem:[%s4 + $0x1a4] sm:$0xf]
  %v584 = vld [vmem:[%s4 + $0x1a8] sm:$0xf]
  %v585 = vld [vmem:[%s4 + $0x1ac] sm:$0xf]
  %v586 = vld [vmem:[%s4 + $0x1b0] sm:$0xf]
  %v587 = vld [vmem:[%s4 + $0x1b4] sm:$0xf]
  %v588 = vld [vmem:[%s4 + $0x1b8] sm:$0xf]
  %v589 = vld [vmem:[%s4 + $0x1bc] sm:$0xf]
  %v590 = vld [vmem:[%s4 + $0x1c0] sm:$0xf]
  %v591 = vld [vmem:[%s4 + $0x1c4] sm:$0xf]
  %v592 = vld [vmem:[%s4 + $0x1c8] sm:$0xf]
  %v593 = vld [vmem:[%s4 + $0x1cc] sm:$0xf]
  %v594 = vld [vmem:[%s4 + $0x1d0] sm:$0xf]
  %v595 = vld [vmem:[%s4 + $0x1d4] sm:$0xf]
  %v596 = vld [vmem:[%s4 + $0x1d8] sm:$0xf]
  %v597 = vld [vmem:[%s4 + $0x1dc] sm:$0xf]
  %v598 = vld [vmem:[%s4 + $0x1e0] sm:$0xf]
  %v599 = vld [vmem:[%s4 + $0x1e4] sm:$0xf]
  %v600 = vld [vmem:[%s4 + $0x1e8] sm:$0xf]
  %v601 = vld [vmem:[%s4 + $0x1ec] sm:$0xf]
  %v602 = vld [vmem:[%s4 + $0x1f0] sm:$0xf]
  %v603 = vld [vmem:[%s4 + $0x1f4] sm:$0xf]
  %v604 = vld [vmem:[%s4 + $0x1f8] sm:$0xf]
  %v605 = vld [vmem:[%s4 + $0x1fc] sm:$0xf]
  %v606 = vld [vmem:[%s4 + $0x200] sm:$0xf]
  %v607 = vld [vmem:[%s4 + $0x204] sm:$0xf]
  %v608 = vld [vmem:[%s4 + $0x208] sm:$0xf]
  %v609 = vld [vmem:[%s4 + $0x20c] sm:$0xf]
  %v610 = vld [vmem:[%s4 + $0x210] sm:$0xf]
  %v611 = vld [vmem:[%s4 + $0x214] sm:$0xf]
  %v612 = vld [vmem:[%s4 + $0x218] sm:$0xf]
  %v613 = vld [vmem:[%s4 + $0x21c] sm:$0xf]
  %v614 = vld [vmem:[%s4 + $0x220] sm:$0xf]
  %v615 = vld [vmem:[%s4 + $0x224] sm:$0xf]
  %v616 = vld [vmem:[%s4 + $0x228] sm:$0xf]
  %v617 = vld [vmem:[%s4 + $0x22c] sm:$0xf]
  %v618 = vld [vmem:[%s4 + $0x230] sm:$0xf]
  %v619 = vld [vmem:[%s4 + $0x234] sm:$0xf]
  %v620 = vld [vmem:[%s4 + $0x238] sm:$0xf]
  %v621 = vld [vmem:[%s4 + $0x23c] sm:$0xf]
  %v622 = vld [vmem:[%s4 + $0x240] sm:$0xf]
  %v623 = vld [vmem:[%s4 + $0x244] sm:$0xf]
  %v624 = vld [vmem:[%s4 + $0x248] sm:$0xf]
  %v625 = vld [vmem:[%s4 + $0x24c] sm:$0xf]
  %v626 = vld [vmem:[%s4 + $0x250] sm:$0xf]
  %v627 = vld [vmem:[%s4 + $0x254] sm:$0xf]
  %v628 = vld [vmem:[%s4 + $0x258] sm:$0xf]
  %v629 = vld [vmem:[%s4 + $0x25c] sm:$0xf]
  %v630 = vld [vmem:[%s4 + $0x260] sm:$0xf]
  %v631 = vld [vmem:[%s4 + $0x264] sm:$0xf]
  %v632 = vld [vmem:[%s4 + $0x268] sm:$0xf]
  %v633 = vld [vmem:[%s4 + $0x26c] sm:$0xf]
  %v634 = vld [vmem:[%s4 + $0x270] sm:$0xf]
  %v635 = vld [vmem:[%s4 + $0x274] sm:$0xf]
  %v636 = vld [vmem:[%s4 + $0x278] sm:$0xf]
  %v637 = vld [vmem:[%s4 + $0x27c] sm:$0xf]
  %v638 = vld [vmem:[%s4 + $0x280] sm:$0xf]
  %v639 = vld [vmem:[%s4 + $0x284] sm:$0xf]
  %v640 = vld [vmem:[%s4 + $0x288] sm:$0xf]
  %v641 = vld [vmem:[%s4 + $0x28c] sm:$0xf]
  %v642 = vld [vmem:[%s4 + $0x290] sm:$0xf]
  %v643 = vld [vmem:[%s4 + $0x294] sm:$0xf]
  %v644 = vld [vmem:[%s4 + $0x298] sm:$0xf]
  %v645 = vld [vmem:[%s4 + $0x29c] sm:$0xf]
  %v646 = vld [vmem:[%s4 + $0x2a0] sm:$0xf]
  %v647 = vld [vmem:[%s4 + $0x2a4] sm:$0xf]
  %v648 = vld [vmem:[%s4 + $0x2a8] sm:$0xf]
  %v649 = vld [vmem:[%s4 + $0x2ac] sm:$0xf]
  %v650 = vld [vmem:[%s4 + $0x2b0] sm:$0xf]
  %v651 = vld [vmem:[%s4 + $0x2b4] sm:$0xf]
  %v652 = vld [vmem:[%s4 + $0x2b8] sm:$0xf]
  %v653 = vld [vmem:[%s4 + $0x2bc] sm:$0xf]
  %v654 = vld [vmem:[%s4 + $0x2c0] sm:$0xf]
  %v655 = vld [vmem:[%s4 + $0x2c4] sm:$0xf]
  %v656 = vld [vmem:[%s4 + $0x2c8] sm:$0xf]
  %v657 = vld [vmem:[%s4 + $0x2cc] sm:$0xf]
  %v658 = vld [vmem:[%s4 + $0x2d0] sm:$0xf]
  %v659 = vld [vmem:[%s4 + $0x2d4] sm:$0xf]
  %v660 = vld [vmem:[%s4 + $0x2d8] sm:$0xf]
  %v661 = vld [vmem:[%s4 + $0x2dc] sm:$0xf]
  %v662 = vld [vmem:[%s4 + $0x2e0] sm:$0xf]
  %v663 = vld [vmem:[%s4 + $0x2e4] sm:$0xf]
  %v664 = vld [vmem:[%s4 + $0x2e8] sm:$0xf]
  %v665 = vld [vmem:[%s4 + $0x2ec] sm:$0xf]
  %v666 = vld [vmem:[%s4 + $0x2f0] sm:$0xf]
  %v667 = vld [vmem:[%s4 + $0x2f4] sm:$0xf]
  %v668 = vld [vmem:[%s4 + $0x2f8] sm:$0xf]
  %v669 = vld [vmem:[%s4 + $0x2fc] sm:$0xf]
  %v670 = vld [vmem:[%s4 + $0x300] sm:$0xf]
  %v671 = vld [vmem:[%s4 + $0x304] sm:$0xf]
  %v672 = vld [vmem:[%s4 + $0x308] sm:$0xf]
  %v673 = vld [vmem:[%s4 + $0x30c] sm:$0xf]
  %v674 = vld [vmem:[%s4 + $0x310] sm:$0xf]
  %v675 = vld [vmem:[%s4 + $0x314] sm:$0xf]
  %v676 = vld [vmem:[%s4 + $0x318] sm:$0xf]
  %v677 = vld [vmem:[%s4 + $0x31c] sm:$0xf]
  %v678 = vld [vmem:[%s4 + $0x320] sm:$0xf]
  %v679 = vld [vmem:[%s4 + $0x324] sm:$0xf]
  %v680 = vld [vmem:[%s4 + $0x328] sm:$0xf]
  %v681 = vld [vmem:[%s4 + $0x32c] sm:$0xf]
  %v682 = vld [vmem:[%s4 + $0x330] sm:$0xf]
  %v683 = vld [vmem:[%s4 + $0x334] sm:$0xf]
  %v684 = vld [vmem:[%s4 + $0x338] sm:$0xf]
  %v685 = vld [vmem:[%s4 + $0x33c] sm:$0xf]
  %v686 = vld [vmem:[%s4 + $0x340] sm:$0xf]
  %v687 = vld [vmem:[%s4 + $0x344] sm:$0xf]
  %v688 = vld [vmem:[%s4 + $0x348] sm:$0xf]
  %v689 = vld [vmem:[%s4 + $0x34c] sm:$0xf]
  %v690 = vld [vmem:[%s4 + $0x350] sm:$0xf]
  %v691 = vld [vmem:[%s4 + $0x354] sm:$0xf]
  %v692 = vld [vmem:[%s4 + $0x358] sm:$0xf]
  %v693 = vld [vmem:[%s4 + $0x35c] sm:$0xf]
  %v694 = vld [vmem:[%s4 + $0x360] sm:$0xf]
  %v695 = vld [vmem:[%s4 + $0x364] sm:$0xf]
  %v696 = vld [vmem:[%s4 + $0x368] sm:$0xf]
  %v697 = vld [vmem:[%s4 + $0x36c] sm:$0xf]
  %v698 = vld [vmem:[%s4 + $0x370] sm:$0xf]
  %v699 = vld [vmem:[%s4 + $0x374] sm:$0xf]
  %v700 = vld [vmem:[%s4 + $0x378] sm:$0xf]
  %v701 = vld [vmem:[%s4 + $0x37c] sm:$0xf]
  %v702 = vld [vmem:[%s4 + $0x380] sm:$0xf]
  %v703 = vld [vmem:[%s4 + $0x384] sm:$0xf]
  %v704 = vld [vmem:[%s4 + $0x388] sm:$0xf]
  %v705 = vld [vmem:[%s4 + $0x38c] sm:$0xf]
  %v706 = vld [vmem:[%s4 + $0x390] sm:$0xf]
  %v707 = vld [vmem:[%s4 + $0x394] sm:$0xf]
  %v708 = vld [vmem:[%s4 + $0x398] sm:$0xf]
  %v709 = vld [vmem:[%s4 + $0x39c] sm:$0xf]
  %v710 = vld [vmem:[%s4 + $0x3a0] sm:$0xf]
  %v711 = vld [vmem:[%s4 + $0x3a4] sm:$0xf]
  %v712 = vld [vmem:[%s4 + $0x3a8] sm:$0xf]
  %v713 = vld [vmem:[%s4 + $0x3ac] sm:$0xf]
  %v714 = vld [vmem:[%s4 + $0x3b0] sm:$0xf]
  %v715 = vld [vmem:[%s4 + $0x3b4] sm:$0xf]
  %v716 = vld [vmem:[%s4 + $0x3b8] sm:$0xf]
  %v717 = vld [vmem:[%s4 + $0x3bc] sm:$0xf]
  %v718 = vld [vmem:[%s4 + $0x3c0] sm:$0xf]
  %v719 = vld [vmem:[%s4 + $0x3c4] sm:$0xf]
  %v720 = vld [vmem:[%s4 + $0x3c8] sm:$0xf]
  %v721 = vld [vmem:[%s4 + $0x3cc] sm:$0xf]
  %v722 = vld [vmem:[%s4 + $0x3d0] sm:$0xf]
  %v723 = vld [vmem:[%s4 + $0x3d4] sm:$0xf]
  %v724 = vld [vmem:[%s4 + $0x3d8] sm:$0xf]
  %v725 = vld [vmem:[%s4 + $0x3dc] sm:$0xf]
  %v726 = vld [vmem:[%s4 + $0x3e0] sm:$0xf]
  %v727 = vld [vmem:[%s4 + $0x3e4] sm:$0xf]
  %v728 = vld [vmem:[%s4 + $0x3e8] sm:$0xf]
  %v729 = vld [vmem:[%s4 + $0x3ec] sm:$0xf]
  %v730 = vld [vmem:[%s4 + $0x3f0] sm:$0xf]
  %v731 = vld [vmem:[%s4 + $0x3f4] sm:$0xf]
  %v732 = vld [vmem:[%s4 + $0x3f8] sm:$0xf]
  %v733 = vld [vmem:[%s4 + $0x3fc] sm:$0xf]
  %v734 = vld [vmem:[%s5] sm:$0x1]
  %v736 = vperm.slane %v734, 0
  %v994 = vunpack.c.l.b16 %v478
  %v995 = vunpack.c.l.b16 %v479
  %v996 = vunpack.c.l.b16 %v480
  %v997 = vunpack.c.l.b16 %v481
  %v998 = vunpack.c.l.b16 %v482
  %v999 = vunpack.c.l.b16 %v483
  %v1000 = vunpack.c.l.b16 %v484
  %v1001 = vunpack.c.l.b16 %v485
  %v1002 = vunpack.c.l.b16 %v486
  %v1003 = vunpack.c.l.b16 %v487
  %v1004 = vunpack.c.l.b16 %v488
  %v1005 = vunpack.c.l.b16 %v489
  %v1006 = vunpack.c.l.b16 %v490
  %v1007 = vunpack.c.l.b16 %v491
  %v1008 = vunpack.c.l.b16 %v492
  %v1009 = vunpack.c.l.b16 %v493
  %v1010 = vunpack.c.l.b16 %v494
  %v1011 = vunpack.c.l.b16 %v495
  %v1012 = vunpack.c.l.b16 %v496
  %v1013 = vunpack.c.l.b16 %v497
  %v1014 = vunpack.c.l.b16 %v498
  %v1015 = vunpack.c.l.b16 %v499
  %v1016 = vunpack.c.l.b16 %v500
  %v1017 = vunpack.c.l.b16 %v501
  %v1018 = vunpack.c.l.b16 %v502
  %v1019 = vunpack.c.l.b16 %v503
  %v1020 = vunpack.c.l.b16 %v504
  %v1021 = vunpack.c.l.b16 %v505
  %v1022 = vunpack.c.l.b16 %v506
  %v1023 = vunpack.c.l.b16 %v507
  %v1024 = vunpack.c.l.b16 %v508
  %v1025 = vunpack.c.l.b16 %v509
  %v1026 = vunpack.c.l.b16 %v510
  %v1027 = vunpack.c.l.b16 %v511
  %v1028 = vunpack.c.l.b16 %v512
  %v1029 = vunpack.c.l.b16 %v513
  %v1030 = vunpack.c.l.b16 %v514
  %v1031 = vunpack.c.l.b16 %v515
  %v1032 = vunpack.c.l.b16 %v516
  %v1033 = vunpack.c.l.b16 %v517
  %v1034 = vunpack.c.l.b16 %v518
  %v1035 = vunpack.c.l.b16 %v519
  %v1036 = vunpack.c.l.b16 %v520
  %v1037 = vunpack.c.l.b16 %v521
  %v1038 = vunpack.c.l.b16 %v522
  %v1039 = vunpack.c.l.b16 %v523
  %v1040 = vunpack.c.l.b16 %v524
  %v1041 = vunpack.c.l.b16 %v525
  %v1042 = vunpack.c.l.b16 %v526
  %v1043 = vunpack.c.l.b16 %v527
  %v1044 = vunpack.c.l.b16 %v528
  %v1045 = vunpack.c.l.b16 %v529
  %v1046 = vunpack.c.l.b16 %v530
  %v1047 = vunpack.c.l.b16 %v531
  %v1048 = vunpack.c.l.b16 %v532
  %v1049 = vunpack.c.l.b16 %v533
  %v1050 = vunpack.c.l.b16 %v534
  %v1051 = vunpack.c.l.b16 %v535
  %v1052 = vunpack.c.l.b16 %v536
  %v1053 = vunpack.c.l.b16 %v537
  %v1054 = vunpack.c.l.b16 %v538
  %v1055 = vunpack.c.l.b16 %v539
  %v1056 = vunpack.c.l.b16 %v540
  %v1057 = vunpack.c.l.b16 %v541
  %v1058 = vunpack.c.l.b16 %v542
  %v1059 = vunpack.c.l.b16 %v543
  %v1060 = vunpack.c.l.b16 %v544
  %v1061 = vunpack.c.l.b16 %v545
  %v1062 = vunpack.c.l.b16 %v546
  %v1063 = vunpack.c.l.b16 %v547
  %v1064 = vunpack.c.l.b16 %v548
  %v1065 = vunpack.c.l.b16 %v549
  %v1066 = vunpack.c.l.b16 %v550
  %v1067 = vunpack.c.l.b16 %v551
  %v1068 = vunpack.c.l.b16 %v552
  %v1069 = vunpack.c.l.b16 %v553
  %v1070 = vunpack.c.l.b16 %v554
  %v1071 = vunpack.c.l.b16 %v555
  %v1072 = vunpack.c.l.b16 %v556
  %v1073 = vunpack.c.l.b16 %v557
  %v1074 = vunpack.c.l.b16 %v558
  %v1075 = vunpack.c.l.b16 %v559
  %v1076 = vunpack.c.l.b16 %v560
  %v1077 = vunpack.c.l.b16 %v561
  %v1078 = vunpack.c.l.b16 %v562
  %v1079 = vunpack.c.l.b16 %v563
  %v1080 = vunpack.c.l.b16 %v564
  %v1081 = vunpack.c.l.b16 %v565
  %v1082 = vunpack.c.l.b16 %v566
  %v1083 = vunpack.c.l.b16 %v567
  %v1084 = vunpack.c.l.b16 %v568
  %v1085 = vunpack.c.l.b16 %v569
  %v1086 = vunpack.c.l.b16 %v570
  %v1087 = vunpack.c.l.b16 %v571
  %v1088 = vunpack.c.l.b16 %v572
  %v1089 = vunpack.c.l.b16 %v573
  %v1090 = vunpack.c.l.b16 %v574
  %v1091 = vunpack.c.l.b16 %v575
  %v1092 = vunpack.c.l.b16 %v576
  %v1093 = vunpack.c.l.b16 %v577
  %v1094 = vunpack.c.l.b16 %v578
  %v1095 = vunpack.c.l.b16 %v579
  %v1096 = vunpack.c.l.b16 %v580
  %v1097 = vunpack.c.l.b16 %v581
  %v1098 = vunpack.c.l.b16 %v582
  %v1099 = vunpack.c.l.b16 %v583
  %v1100 = vunpack.c.l.b16 %v584
  %v1101 = vunpack.c.l.b16 %v585
  %v1102 = vunpack.c.l.b16 %v586
  %v1103 = vunpack.c.l.b16 %v587
  %v1104 = vunpack.c.l.b16 %v588
  %v1105 = vunpack.c.l.b16 %v589
  %v1106 = vunpack.c.l.b16 %v590
  %v1107 = vunpack.c.l.b16 %v591
  %v1108 = vunpack.c.l.b16 %v592
  %v1109 = vunpack.c.l.b16 %v593
  %v1110 = vunpack.c.l.b16 %v594
  %v1111 = vunpack.c.l.b16 %v595
  %v1112 = vunpack.c.l.b16 %v596
  %v1113 = vunpack.c.l.b16 %v597
  %v1114 = vunpack.c.l.b16 %v598
  %v1115 = vunpack.c.l.b16 %v599
  %v1116 = vunpack.c.l.b16 %v600
  %v1117 = vunpack.c.l.b16 %v601
  %v1118 = vunpack.c.l.b16 %v602
  %v1119 = vunpack.c.l.b16 %v603
  %v1120 = vunpack.c.l.b16 %v604
  %v1121 = vunpack.c.l.b16 %v605
  %v1122 = vunpack.c.l.b16 %v606
  %v1123 = vunpack.c.l.b16 %v607
  %v1124 = vunpack.c.l.b16 %v608
  %v1125 = vunpack.c.l.b16 %v609
  %v1126 = vunpack.c.l.b16 %v610
  %v1127 = vunpack.c.l.b16 %v611
  %v1128 = vunpack.c.l.b16 %v612
  %v1129 = vunpack.c.l.b16 %v613
  %v1130 = vunpack.c.l.b16 %v614
  %v1131 = vunpack.c.l.b16 %v615
  %v1132 = vunpack.c.l.b16 %v616
  %v1133 = vunpack.c.l.b16 %v617
  %v1134 = vunpack.c.l.b16 %v618
  %v1135 = vunpack.c.l.b16 %v619
  %v1136 = vunpack.c.l.b16 %v620
  %v1137 = vunpack.c.l.b16 %v621
  %v1138 = vunpack.c.l.b16 %v622
  %v1139 = vunpack.c.l.b16 %v623
  %v1140 = vunpack.c.l.b16 %v624
  %v1141 = vunpack.c.l.b16 %v625
  %v1142 = vunpack.c.l.b16 %v626
  %v1143 = vunpack.c.l.b16 %v627
  %v1144 = vunpack.c.l.b16 %v628
  %v1145 = vunpack.c.l.b16 %v629
  %v1146 = vunpack.c.l.b16 %v630
  %v1147 = vunpack.c.l.b16 %v631
  %v1148 = vunpack.c.l.b16 %v632
  %v1149 = vunpack.c.l.b16 %v633
  %v1150 = vunpack.c.l.b16 %v634
  %v1151 = vunpack.c.l.b16 %v635
  %v1152 = vunpack.c.l.b16 %v636
  %v1153 = vunpack.c.l.b16 %v637
  %v1154 = vunpack.c.l.b16 %v638
  %v1155 = vunpack.c.l.b16 %v639
  %v1156 = vunpack.c.l.b16 %v640
  %v1157 = vunpack.c.l.b16 %v641
  %v1158 = vunpack.c.l.b16 %v642
  %v1159 = vunpack.c.l.b16 %v643
  %v1160 = vunpack.c.l.b16 %v644
  %v1161 = vunpack.c.l.b16 %v645
  %v1162 = vunpack.c.l.b16 %v646
  %v1163 = vunpack.c.l.b16 %v647
  %v1164 = vunpack.c.l.b16 %v648
  %v1165 = vunpack.c.l.b16 %v649
  %v1166 = vunpack.c.l.b16 %v650
  %v1167 = vunpack.c.l.b16 %v651
  %v1168 = vunpack.c.l.b16 %v652
  %v1169 = vunpack.c.l.b16 %v653
  %v1170 = vunpack.c.l.b16 %v654
  %v1171 = vunpack.c.l.b16 %v655
  %v1172 = vunpack.c.l.b16 %v656
  %v1173 = vunpack.c.l.b16 %v657
  %v1174 = vunpack.c.l.b16 %v658
  %v1175 = vunpack.c.l.b16 %v659
  %v1176 = vunpack.c.l.b16 %v660
  %v1177 = vunpack.c.l.b16 %v661
  %v1178 = vunpack.c.l.b16 %v662
  %v1179 = vunpack.c.l.b16 %v663
  %v1180 = vunpack.c.l.b16 %v664
  %v1181 = vunpack.c.l.b16 %v665
  %v1182 = vunpack.c.l.b16 %v666
  %v1183 = vunpack.c.l.b16 %v667
  %v1184 = vunpack.c.l.b16 %v668
  %v1185 = vunpack.c.l.b16 %v669
  %v1186 = vunpack.c.l.b16 %v670
  %v1187 = vunpack.c.l.b16 %v671
  %v1188 = vunpack.c.l.b16 %v672
  %v1189 = vunpack.c.l.b16 %v673
  %v1190 = vunpack.c.l.b16 %v674
  %v1191 = vunpack.c.l.b16 %v675
  %v1192 = vunpack.c.l.b16 %v676
  %v1193 = vunpack.c.l.b16 %v677
  %v1194 = vunpack.c.l.b16 %v678
  %v1195 = vunpack.c.l.b16 %v679
  %v1196 = vunpack.c.l.b16 %v680
  %v1197 = vunpack.c.l.b16 %v681
  %v1198 = vunpack.c.l.b16 %v682
  %v1199 = vunpack.c.l.b16 %v683
  %v1200 = vunpack.c.l.b16 %v684
  %v1201 = vunpack.c.l.b16 %v685
  %v1202 = vunpack.c.l.b16 %v686
  %v1203 = vunpack.c.l.b16 %v687
  %v1204 = vunpack.c.l.b16 %v688
  %v1205 = vunpack.c.l.b16 %v689
  %v1206 = vunpack.c.l.b16 %v690
  %v1207 = vunpack.c.l.b16 %v691
  %v1208 = vunpack.c.l.b16 %v692
  %v1209 = vunpack.c.l.b16 %v693
  %v1210 = vunpack.c.l.b16 %v694
  %v1211 = vunpack.c.l.b16 %v695
  %v1212 = vunpack.c.l.b16 %v696
  %v1213 = vunpack.c.l.b16 %v697
  %v1214 = vunpack.c.l.b16 %v698
  %v1215 = vunpack.c.l.b16 %v699
  %v1216 = vunpack.c.l.b16 %v700
  %v1217 = vunpack.c.l.b16 %v701
  %v1218 = vunpack.c.l.b16 %v702
  %v1219 = vunpack.c.l.b16 %v703
  %v1220 = vunpack.c.l.b16 %v704
  %v1221 = vunpack.c.l.b16 %v705
  %v1222 = vunpack.c.l.b16 %v706
  %v1223 = vunpack.c.l.b16 %v707
  %v1224 = vunpack.c.l.b16 %v708
  %v1225 = vunpack.c.l.b16 %v709
  %v1226 = vunpack.c.l.b16 %v710
  %v1227 = vunpack.c.l.b16 %v711
  %v1228 = vunpack.c.l.b16 %v712
  %v1229 = vunpack.c.l.b16 %v713
  %v1230 = vunpack.c.l.b16 %v714
  %v1231 = vunpack.c.l.b16 %v715
  %v1232 = vunpack.c.l.b16 %v716
  %v1233 = vunpack.c.l.b16 %v717
  %v1234 = vunpack.c.l.b16 %v718
  %v1235 = vunpack.c.l.b16 %v719
  %v1236 = vunpack.c.l.b16 %v720
  %v1237 = vunpack.c.l.b16 %v721
  %v1238 = vunpack.c.l.b16 %v722
  %v1239 = vunpack.c.l.b16 %v723
  %v1240 = vunpack.c.l.b16 %v724
  %v1241 = vunpack.c.l.b16 %v725
  %v1242 = vunpack.c.l.b16 %v726
  %v1243 = vunpack.c.l.b16 %v727
  %v1244 = vunpack.c.l.b16 %v728
  %v1245 = vunpack.c.l.b16 %v729
  %v1246 = vunpack.c.l.b16 %v730
  %v1247 = vunpack.c.l.b16 %v731
  %v1248 = vunpack.c.l.b16 %v732
  %v1249 = vunpack.c.l.b16 %v733
  %v1250 = vpack.c.b16 %v995, %v994
  %v1251 = vpack.c.b16 %v997, %v996
  %v1252 = vpack.c.b16 %v999, %v998
  %v1253 = vpack.c.b16 %v1001, %v1000
  %v1254 = vpack.c.b16 %v1003, %v1002
  %v1255 = vpack.c.b16 %v1005, %v1004
  %v1256 = vpack.c.b16 %v1007, %v1006
  %v1257 = vpack.c.b16 %v1009, %v1008
  %v1258 = vpack.c.b16 %v1011, %v1010
  %v1259 = vpack.c.b16 %v1013, %v1012
  %v1260 = vpack.c.b16 %v1015, %v1014
  %v1261 = vpack.c.b16 %v1017, %v1016
  %v1262 = vpack.c.b16 %v1019, %v1018
  %v1263 = vpack.c.b16 %v1021, %v1020
  %v1264 = vpack.c.b16 %v1023, %v1022
  %v1265 = vpack.c.b16 %v1025, %v1024
  %v1266 = vpack.c.b16 %v1027, %v1026
  %v1267 = vpack.c.b16 %v1029, %v1028
  %v1268 = vpack.c.b16 %v1031, %v1030
  %v1269 = vpack.c.b16 %v1033, %v1032
  %v1270 = vpack.c.b16 %v1035, %v1034
  %v1271 = vpack.c.b16 %v1037, %v1036
  %v1272 = vpack.c.b16 %v1039, %v1038
  %v1273 = vpack.c.b16 %v1041, %v1040
  %v1274 = vpack.c.b16 %v1043, %v1042
  %v1275 = vpack.c.b16 %v1045, %v1044
  %v1276 = vpack.c.b16 %v1047, %v1046
  %v1277 = vpack.c.b16 %v1049, %v1048
  %v1278 = vpack.c.b16 %v1051, %v1050
  %v1279 = vpack.c.b16 %v1053, %v1052
  %v1280 = vpack.c.b16 %v1055, %v1054
  %v1281 = vpack.c.b16 %v1057, %v1056
  %v1282 = vpack.c.b16 %v1059, %v1058
  %v1283 = vpack.c.b16 %v1061, %v1060
  %v1284 = vpack.c.b16 %v1063, %v1062
  %v1285 = vpack.c.b16 %v1065, %v1064
  %v1286 = vpack.c.b16 %v1067, %v1066
  %v1287 = vpack.c.b16 %v1069, %v1068
  %v1288 = vpack.c.b16 %v1071, %v1070
  %v1289 = vpack.c.b16 %v1073, %v1072
  %v1290 = vpack.c.b16 %v1075, %v1074
  %v1291 = vpack.c.b16 %v1077, %v1076
  %v1292 = vpack.c.b16 %v1079, %v1078
  %v1293 = vpack.c.b16 %v1081, %v1080
  %v1294 = vpack.c.b16 %v1083, %v1082
  %v1295 = vpack.c.b16 %v1085, %v1084
  %v1296 = vpack.c.b16 %v1087, %v1086
  %v1297 = vpack.c.b16 %v1089, %v1088
  %v1298 = vpack.c.b16 %v1091, %v1090
  %v1299 = vpack.c.b16 %v1093, %v1092
  %v1300 = vpack.c.b16 %v1095, %v1094
  %v1301 = vpack.c.b16 %v1097, %v1096
  %v1302 = vpack.c.b16 %v1099, %v1098
  %v1303 = vpack.c.b16 %v1101, %v1100
  %v1304 = vpack.c.b16 %v1103, %v1102
  %v1305 = vpack.c.b16 %v1105, %v1104
  %v1306 = vpack.c.b16 %v1107, %v1106
  %v1307 = vpack.c.b16 %v1109, %v1108
  %v1308 = vpack.c.b16 %v1111, %v1110
  %v1309 = vpack.c.b16 %v1113, %v1112
  %v1310 = vpack.c.b16 %v1115, %v1114
  %v1311 = vpack.c.b16 %v1117, %v1116
  %v1312 = vpack.c.b16 %v1119, %v1118
  %v1313 = vpack.c.b16 %v1121, %v1120
  %v1314 = vpack.c.b16 %v1123, %v1122
  %v1315 = vpack.c.b16 %v1125, %v1124
  %v1316 = vpack.c.b16 %v1127, %v1126
  %v1317 = vpack.c.b16 %v1129, %v1128
  %v1318 = vpack.c.b16 %v1131, %v1130
  %v1319 = vpack.c.b16 %v1133, %v1132
  %v1320 = vpack.c.b16 %v1135, %v1134
  %v1321 = vpack.c.b16 %v1137, %v1136
  %v1322 = vpack.c.b16 %v1139, %v1138
  %v1323 = vpack.c.b16 %v1141, %v1140
  %v1324 = vpack.c.b16 %v1143, %v1142
  %v1325 = vpack.c.b16 %v1145, %v1144
  %v1326 = vpack.c.b16 %v1147, %v1146
  %v1327 = vpack.c.b16 %v1149, %v1148
  %v1328 = vpack.c.b16 %v1151, %v1150
  %v1329 = vpack.c.b16 %v1153, %v1152
  %v1330 = vpack.c.b16 %v1155, %v1154
  %v1331 = vpack.c.b16 %v1157, %v1156
  %v1332 = vpack.c.b16 %v1159, %v1158
  %v1333 = vpack.c.b16 %v1161, %v1160
  %v1334 = vpack.c.b16 %v1163, %v1162
  %v1335 = vpack.c.b16 %v1165, %v1164
  %v1336 = vpack.c.b16 %v1167, %v1166
  %v1337 = vpack.c.b16 %v1169, %v1168
  %v1338 = vpack.c.b16 %v1171, %v1170
  %v1339 = vpack.c.b16 %v1173, %v1172
  %v1340 = vpack.c.b16 %v1175, %v1174
  %v1341 = vpack.c.b16 %v1177, %v1176
  %v1342 = vpack.c.b16 %v1179, %v1178
  %v1343 = vpack.c.b16 %v1181, %v1180
  %v1344 = vpack.c.b16 %v1183, %v1182
  %v1345 = vpack.c.b16 %v1185, %v1184
  %v1346 = vpack.c.b16 %v1187, %v1186
  %v1347 = vpack.c.b16 %v1189, %v1188
  %v1348 = vpack.c.b16 %v1191, %v1190
  %v1349 = vpack.c.b16 %v1193, %v1192
  %v1350 = vpack.c.b16 %v1195, %v1194
  %v1351 = vpack.c.b16 %v1197, %v1196
  %v1352 = vpack.c.b16 %v1199, %v1198
  %v1353 = vpack.c.b16 %v1201, %v1200
  %v1354 = vpack.c.b16 %v1203, %v1202
  %v1355 = vpack.c.b16 %v1205, %v1204
  %v1356 = vpack.c.b16 %v1207, %v1206
  %v1357 = vpack.c.b16 %v1209, %v1208
  %v1358 = vpack.c.b16 %v1211, %v1210
  %v1359 = vpack.c.b16 %v1213, %v1212
  %v1360 = vpack.c.b16 %v1215, %v1214
  %v1361 = vpack.c.b16 %v1217, %v1216
  %v1362 = vpack.c.b16 %v1219, %v1218
  %v1363 = vpack.c.b16 %v1221, %v1220
  %v1364 = vpack.c.b16 %v1223, %v1222
  %v1365 = vpack.c.b16 %v1225, %v1224
  %v1366 = vpack.c.b16 %v1227, %v1226
  %v1367 = vpack.c.b16 %v1229, %v1228
  %v1368 = vpack.c.b16 %v1231, %v1230
  %v1369 = vpack.c.b16 %v1233, %v1232
  %v1370 = vpack.c.b16 %v1235, %v1234
  %v1371 = vpack.c.b16 %v1237, %v1236
  %v1372 = vpack.c.b16 %v1239, %v1238
  %v1373 = vpack.c.b16 %v1241, %v1240
  %v1374 = vpack.c.b16 %v1243, %v1242
  %v1375 = vpack.c.b16 %v1245, %v1244
  %v1376 = vpack.c.b16 %v1247, %v1246
  %v1377 = vpack.c.b16 %v1249, %v1248
  %1506 = vmatpush.bf16.msra.mxu0 %v1257
  %1507 = vmatpush.bf16.msra.mxu0 %v1256
  %1508 = vmatpush.bf16.msra.mxu0 %v1255
  %1509 = vmatpush.bf16.msra.mxu0 %v1254
  %1510 = vmatpush.bf16.msra.mxu0 %v1253
  %1511 = vmatpush.bf16.msra.mxu0 %v1252
  %1512 = vmatpush.bf16.msra.mxu0 %v1251
  %1513 = vmatpush.bf16.msra.mxu0 %v1250
  %1514 = vmatmul.bf16.gmra.mxu0 %v462
  %v1515 = vpop.f32.mrf.mxu0
  %v1516 = vadd.f32 %v736, %v1515
  %v1517 = vpop.f32.mrf.mxu0
  %1518 = vdwg.mxu0
  %1519 = vmatpush.bf16.msra.mxu0 %v1265
  %1520 = vmatpush.bf16.msra.mxu0 %v1264
  %1521 = vmatpush.bf16.msra.mxu0 %v1263
  %1522 = vmatpush.bf16.msra.mxu0 %v1262
  %1523 = vmatpush.bf16.msra.mxu0 %v1261
  %1524 = vmatpush.bf16.msra.mxu0 %v1260
  %1525 = vmatpush.bf16.msra.mxu0 %v1259
  %1526 = vmatpush.bf16.msra.mxu0 %v1258
  %1527 = vmatmul.bf16.gmra.mxu0 %v463
  %v1528 = vpop.f32.mrf.mxu0
  %v1529 = vadd.f32 %v1516, %v1528
  %v1530 = vpop.f32.mrf.mxu0
  %1531 = vdwg.mxu0
  %1532 = vmatpush.bf16.msra.mxu0 %v1273
  %1533 = vmatpush.bf16.msra.mxu0 %v1272
  %1534 = vmatpush.bf16.msra.mxu0 %v1271
  %1535 = vmatpush.bf16.msra.mxu0 %v1270
  %1536 = vmatpush.bf16.msra.mxu0 %v1269
  %1537 = vmatpush.bf16.msra.mxu0 %v1268
  %1538 = vmatpush.bf16.msra.mxu0 %v1267
  %1539 = vmatpush.bf16.msra.mxu0 %v1266
  %1540 = vmatmul.bf16.gmra.mxu0 %v464
  %v1541 = vpop.f32.mrf.mxu0
  %v1542 = vadd.f32 %v1529, %v1541
  %v1543 = vpop.f32.mrf.mxu0
  %1544 = vdwg.mxu0
  %1545 = vmatpush.bf16.msra.mxu0 %v1281
  %1546 = vmatpush.bf16.msra.mxu0 %v1280
  %1547 = vmatpush.bf16.msra.mxu0 %v1279
  %1548 = vmatpush.bf16.msra.mxu0 %v1278
  %1549 = vmatpush.bf16.msra.mxu0 %v1277
  %1550 = vmatpush.bf16.msra.mxu0 %v1276
  %1551 = vmatpush.bf16.msra.mxu0 %v1275
  %1552 = vmatpush.bf16.msra.mxu0 %v1274
  %1553 = vmatmul.bf16.gmra.mxu0 %v465
  %v1554 = vpop.f32.mrf.mxu0
  %v1555 = vadd.f32 %v1542, %v1554
  %v1556 = vpop.f32.mrf.mxu0
  %1557 = vdwg.mxu0
  %1558 = vmatpush.bf16.msra.mxu0 %v1289
  %1559 = vmatpush.bf16.msra.mxu0 %v1288
  %1560 = vmatpush.bf16.msra.mxu0 %v1287
  %1561 = vmatpush.bf16.msra.mxu0 %v1286
  %1562 = vmatpush.bf16.msra.mxu0 %v1285
  %1563 = vmatpush.bf16.msra.mxu0 %v1284
  %1564 = vmatpush.bf16.msra.mxu0 %v1283
  %1565 = vmatpush.bf16.msra.mxu0 %v1282
  %1566 = vmatmul.bf16.gmra.mxu0 %v466
  %v1567 = vpop.f32.mrf.mxu0
  %v1568 = vadd.f32 %v1555, %v1567
  %v1569 = vpop.f32.mrf.mxu0
  %1570 = vdwg.mxu0
  %1571 = vmatpush.bf16.msra.mxu0 %v1297
  %1572 = vmatpush.bf16.msra.mxu0 %v1296
  %1573 = vmatpush.bf16.msra.mxu0 %v1295
  %1574 = vmatpush.bf16.msra.mxu0 %v1294
  %1575 = vmatpush.bf16.msra.mxu0 %v1293
  %1576 = vmatpush.bf16.msra.mxu0 %v1292
  %1577 = vmatpush.bf16.msra.mxu0 %v1291
  %1578 = vmatpush.bf16.msra.mxu0 %v1290
  %1579 = vmatmul.bf16.gmra.mxu0 %v467
  %v1580 = vpop.f32.mrf.mxu0
  %v1581 = vadd.f32 %v1568, %v1580
  %v1582 = vpop.f32.mrf.mxu0
  %1583 = vdwg.mxu0
  %1584 = vmatpush.bf16.msra.mxu0 %v1305
  %1585 = vmatpush.bf16.msra.mxu0 %v1304
  %1586 = vmatpush.bf16.msra.mxu0 %v1303
  %1587 = vmatpush.bf16.msra.mxu0 %v1302
  %1588 = vmatpush.bf16.msra.mxu0 %v1301
  %1589 = vmatpush.bf16.msra.mxu0 %v1300
  %1590 = vmatpush.bf16.msra.mxu0 %v1299
  %1591 = vmatpush.bf16.msra.mxu0 %v1298
  %1592 = vmatmul.bf16.gmra.mxu0 %v468
  %v1593 = vpop.f32.mrf.mxu0
  %v1594 = vadd.f32 %v1581, %v1593
  %v1595 = vpop.f32.mrf.mxu0
  %1596 = vdwg.mxu0
  %1597 = vmatpush.bf16.msra.mxu0 %v1313
  %1598 = vmatpush.bf16.msra.mxu0 %v1312
  %1599 = vmatpush.bf16.msra.mxu0 %v1311
  %1600 = vmatpush.bf16.msra.mxu0 %v1310
  %1601 = vmatpush.bf16.msra.mxu0 %v1309
  %1602 = vmatpush.bf16.msra.mxu0 %v1308
  %1603 = vmatpush.bf16.msra.mxu0 %v1307
  %1604 = vmatpush.bf16.msra.mxu0 %v1306
  %1605 = vmatmul.bf16.gmra.mxu0 %v469
  %v1606 = vpop.f32.mrf.mxu0
  %v1607 = vadd.f32 %v1594, %v1606
  %v1608 = vpop.f32.mrf.mxu0
  %1609 = vdwg.mxu0
  %1610 = vmatpush.bf16.msra.mxu0 %v1321
  %1611 = vmatpush.bf16.msra.mxu0 %v1320
  %1612 = vmatpush.bf16.msra.mxu0 %v1319
  %1613 = vmatpush.bf16.msra.mxu0 %v1318
  %1614 = vmatpush.bf16.msra.mxu0 %v1317
  %1615 = vmatpush.bf16.msra.mxu0 %v1316
  %1616 = vmatpush.bf16.msra.mxu0 %v1315
  %1617 = vmatpush.bf16.msra.mxu0 %v1314
  %1618 = vmatmul.bf16.gmra.mxu0 %v470
  %v1619 = vpop.f32.mrf.mxu0
  %v1620 = vadd.f32 %v1607, %v1619
  %v1621 = vpop.f32.mrf.mxu0
  %1622 = vdwg.mxu0
  %1623 = vmatpush.bf16.msra.mxu0 %v1329
  %1624 = vmatpush.bf16.msra.mxu0 %v1328
  %1625 = vmatpush.bf16.msra.mxu0 %v1327
  %1626 = vmatpush.bf16.msra.mxu0 %v1326
  %1627 = vmatpush.bf16.msra.mxu0 %v1325
  %1628 = vmatpush.bf16.msra.mxu0 %v1324
  %1629 = vmatpush.bf16.msra.mxu0 %v1323
  %1630 = vmatpush.bf16.msra.mxu0 %v1322
  %1631 = vmatmul.bf16.gmra.mxu0 %v471
  %v1632 = vpop.f32.mrf.mxu0
  %v1633 = vadd.f32 %v1620, %v1632
  %v1634 = vpop.f32.mrf.mxu0
  %1635 = vdwg.mxu0
  %1636 = vmatpush.bf16.msra.mxu0 %v1337
  %1637 = vmatpush.bf16.msra.mxu0 %v1336
  %1638 = vmatpush.bf16.msra.mxu0 %v1335
  %1639 = vmatpush.bf16.msra.mxu0 %v1334
  %1640 = vmatpush.bf16.msra.mxu0 %v1333
  %1641 = vmatpush.bf16.msra.mxu0 %v1332
  %1642 = vmatpush.bf16.msra.mxu0 %v1331
  %1643 = vmatpush.bf16.msra.mxu0 %v1330
  %1644 = vmatmul.bf16.gmra.mxu0 %v472
  %v1645 = vpop.f32.mrf.mxu0
  %v1646 = vadd.f32 %v1633, %v1645
  %v1647 = vpop.f32.mrf.mxu0
  %1648 = vdwg.mxu0
  %1649 = vmatpush.bf16.msra.mxu0 %v1345
  %1650 = vmatpush.bf16.msra.mxu0 %v1344
  %1651 = vmatpush.bf16.msra.mxu0 %v1343
  %1652 = vmatpush.bf16.msra.mxu0 %v1342
  %1653 = vmatpush.bf16.msra.mxu0 %v1341
  %1654 = vmatpush.bf16.msra.mxu0 %v1340
  %1655 = vmatpush.bf16.msra.mxu0 %v1339
  %1656 = vmatpush.bf16.msra.mxu0 %v1338
  %1657 = vmatmul.bf16.gmra.mxu0 %v473
  %v1658 = vpop.f32.mrf.mxu0
  %v1659 = vadd.f32 %v1646, %v1658
  %v1660 = vpop.f32.mrf.mxu0
  %1661 = vdwg.mxu0
  %1662 = vmatpush.bf16.msra.mxu0 %v1353
  %1663 = vmatpush.bf16.msra.mxu0 %v1352
  %1664 = vmatpush.bf16.msra.mxu0 %v1351
  %1665 = vmatpush.bf16.msra.mxu0 %v1350
  %1666 = vmatpush.bf16.msra.mxu0 %v1349
  %1667 = vmatpush.bf16.msra.mxu0 %v1348
  %1668 = vmatpush.bf16.msra.mxu0 %v1347
  %1669 = vmatpush.bf16.msra.mxu0 %v1346
  %1670 = vmatmul.bf16.gmra.mxu0 %v474
  %v1671 = vpop.f32.mrf.mxu0
  %v1672 = vadd.f32 %v1659, %v1671
  %v1673 = vpop.f32.mrf.mxu0
  %1674 = vdwg.mxu0
  %1675 = vmatpush.bf16.msra.mxu0 %v1361
  %1676 = vmatpush.bf16.msra.mxu0 %v1360
  %1677 = vmatpush.bf16.msra.mxu0 %v1359
  %1678 = vmatpush.bf16.msra.mxu0 %v1358
  %1679 = vmatpush.bf16.msra.mxu0 %v1357
  %1680 = vmatpush.bf16.msra.mxu0 %v1356
  %1681 = vmatpush.bf16.msra.mxu0 %v1355
  %1682 = vmatpush.bf16.msra.mxu0 %v1354
  %1683 = vmatmul.bf16.gmra.mxu0 %v475
  %v1684 = vpop.f32.mrf.mxu0
  %v1685 = vadd.f32 %v1672, %v1684
  %v1686 = vpop.f32.mrf.mxu0
  %1687 = vdwg.mxu0
  %1688 = vmatpush.bf16.msra.mxu0 %v1369
  %1689 = vmatpush.bf16.msra.mxu0 %v1368
  %1690 = vmatpush.bf16.msra.mxu0 %v1367
  %1691 = vmatpush.bf16.msra.mxu0 %v1366
  %1692 = vmatpush.bf16.msra.mxu0 %v1365
  %1693 = vmatpush.bf16.msra.mxu0 %v1364
  %1694 = vmatpush.bf16.msra.mxu0 %v1363
  %1695 = vmatpush.bf16.msra.mxu0 %v1362
  %1696 = vmatmul.bf16.gmra.mxu0 %v476
  %v1697 = vpop.f32.mrf.mxu0
  %v1698 = vadd.f32 %v1685, %v1697
  %v1699 = vpop.f32.mrf.mxu0
  %1700 = vdwg.mxu0
  %1701 = vmatpush.bf16.msra.mxu0 %v1377
  %1702 = vmatpush.bf16.msra.mxu0 %v1376
  %1703 = vmatpush.bf16.msra.mxu0 %v1375
  %1704 = vmatpush.bf16.msra.mxu0 %v1374
  %1705 = vmatpush.bf16.msra.mxu0 %v1373
  %1706 = vmatpush.bf16.msra.mxu0 %v1372
  %1707 = vmatpush.bf16.msra.mxu0 %v1371
  %1708 = vmatpush.bf16.msra.mxu0 %v1370
  %1709 = vmatmul.bf16.gmra.mxu0 %v477
  %v1710 = vpop.f32.mrf.mxu0
  %v1711 = vadd.f32 %v1698, %v1710
  %v1712 = vpop.f32.mrf.mxu0
  %1713 = vdwg.mxu0
  %v1714 = vmax.f32 %v1711, 0.0
  %v1715 = vld [vmem:[%s6] sm:$0x1]
  %v1717 = vperm.slane %v1715, 0
  %v1719 = vmul.f32 %v1714, %v1717
  %vm1720 = vcmask 1041408
  %v1721 = vsel %vm1720, %v1719, 0.0
  %1722 = vadd.xlane.f32.xlu0 %v1721
  %v1723 = vpop.xlane.xlu0 %1722
  %v1724 = vld [vmem:[#allocation3] sm:$0x1]
  %v1726 = vperm.slane %v1724, 0
  %v1728 = vadd.f32 %v1723, %v1726
  %vm1729 = vcmask 1024
  %1730 = vst.msk [vmem:[%s8] sm:$0x3] %vm1729, %v1728
  // Predicated region
  $region34: #{chess_elo_head_forward.1} parent=0 // pred_check
    _
  $region35: #{chess_elo_head_forward.1} parent=0 // pred_check_branch
    %1732 = sbr.rel (0) target = $region37
  $region36: #{chess_elo_head_forward.1} parent=0 // pred_region
    _
  $region37: #{chess_elo_head_forward.1} parent=0 // pred_fallthru
    _
  // Predicated region
  $region38: #{chess_elo_head_forward.1} parent=0 // pred_check
    _
  $region39: #{chess_elo_head_forward.1} parent=0 // pred_check_branch
    %1734 = sbr.rel (0) target = $region41
  $region40: #{chess_elo_head_forward.1} parent=0 // pred_region
    _
  $region41: #{chess_elo_head_forward.1} parent=0 // pred_fallthru
    _

</llo_original>
